<compile_context>
chip_gen: v5e
topology: v5e:2x2
jax: 0.10.0
libtpu: 0.0.40
codegen_flags: <defaults>
</compile_context>

<pallas_src>
from functools import partial

import jax
import jax.numpy as jnp
from jax.experimental import pallas as pl
from jax.experimental.pallas import tpu as pltpu

IMG_DIM = 1 * 28 * 28          # 784
OUT_PAD = 896                  # next multiple of 128 -> lane-dense output stores


def _round_up(x, m):
    return ((x + m - 1) // m) * m


def _num_tensorcores():
    """2 on v7x (megacore), 1 on v5e/v6e. Robust to missing attributes."""
    try:
        kind = (jax.devices()[0].device_kind or "").lower()
    except Exception:
        return 1
    return 2 if "v7" in kind else 1


# --------------------------------------------------------------------------
# Kernel
# --------------------------------------------------------------------------
def generator_kernel(z_ref,
                     w1_ref, b1_ref,
                     w2_ref, b2_ref,
                     w3_ref, b3_ref,
                     w4_ref, b4_ref,
                     out_ref):
    # Layer 1: Linear + ReLU   (bf16 MXU matmul, f32 accumulation)
    h = jnp.dot(z_ref[...], w1_ref[...], preferred_element_type=jnp.float32)
    h = jnp.maximum(h + b1_ref[...], 0.0)
    # Layer 2: Linear + ReLU
    h = jnp.dot(h.astype(jnp.bfloat16), w2_ref[...],
                preferred_element_type=jnp.float32)
    h = jnp.maximum(h + b2_ref[...], 0.0)
    # Layer 3: Linear + ReLU
    h = jnp.dot(h.astype(jnp.bfloat16), w3_ref[...],
                preferred_element_type=jnp.float32)
    h = jnp.maximum(h + b3_ref[...], 0.0)
    # Layer 4: Linear + Tanh.  Output columns are padded to 896 with all-zero
    # weights/bias -> tanh(0)=0; pad columns are dropped in the wrapper.
    h = jnp.dot(h.astype(jnp.bfloat16), w4_ref[...],
                preferred_element_type=jnp.float32)
    # tanh in f32 (v5e EUP has no bf16), store bf16 to halve HBM writeback.
    out_ref[...] = jnp.tanh(h + b4_ref[...]).astype(out_ref.dtype)


# --------------------------------------------------------------------------
# Parameter preparation (hoisted out of the per-call forward path)
# --------------------------------------------------------------------------
def prepare_params(params):
    """Cast weights to bf16, biases to f32 (1, out), and zero-pad the final
    layer to OUT_PAD columns.  Call once; reuse the result for every forward."""
    (w1, b1), (w2, b2), (w3, b3), (w4, b4) = params
    out_dim = w4.shape[1]
    assert out_dim == IMG_DIM

    w4b = jnp.zeros((w4.shape[0], OUT_PAD), jnp.bfloat16)
    w4b = w4b.at[:, :out_dim].set(w4.astype(jnp.bfloat16))
    b4p = jnp.zeros((1, OUT_PAD), jnp.float32)
    b4p = b4p.at[:, :out_dim].set(b4.astype(jnp.float32).reshape(1, -1))

    return (
        w1.astype(jnp.bfloat16), b1.astype(jnp.float32).reshape(1, -1),
        w2.astype(jnp.bfloat16), b2.astype(jnp.float32).reshape(1, -1),
        w3.astype(jnp.bfloat16), b3.astype(jnp.float32).reshape(1, -1),
        w4b, b4p,
    )


# --------------------------------------------------------------------------
# Tile selection (generation-aware)
# --------------------------------------------------------------------------
def _select_block_b(B, num_tc, cap=512):
    """Batch tile: a multiple of 128 (minimum 64), capped at `cap`.
    On 2-TC chips (v7x) split single tiles / keep n_blocks even."""
    if B <= 64:
        return 64
    blk = min(cap, _round_up(B, 128))
    if num_tc >= 2:
        n = pl.cdiv(B, blk)
        if n == 1 and B > 128:
            # Split the single tile so both TensorCores get a grid step.
            blk = min(blk, _round_up(pl.cdiv(B, 2), 128))
        elif n > 1 and n % 2 == 1:
            # Prefer an even number of grid steps -> balanced megacore.
            blk2 = _round_up(pl.cdiv(B, n + 1), 128)
            if blk2 >= 128 and pl.cdiv(B, blk2) % 2 == 0:
                blk = blk2
    return blk


# --------------------------------------------------------------------------
# Forward
# --------------------------------------------------------------------------
def generator_forward(z, prepared, *, slice_output=True, num_tc=None,
                      block_cap=512):
    """Fused generator MLP.
    z: (B, latent_dim) float32 -> (B, 784) bfloat16 (or (B_pad, 896) if
    slice_output=False, letting the consumer fuse the slice)."""
    w1b, b1f, w2b, b2f, w3b, b3f, w4b, b4p = prepared
    B, latent_dim = z.shape

    if num_tc is None:
        num_tc = _num_tensorcores()
    block_b = _select_block_b(B, num_tc, cap=block_cap)
    n_blocks = pl.cdiv(B, block_b)
    B_pad = n_blocks * block_b

    z_bf = z.astype(jnp.bfloat16)
    if B_pad != B:
        z_bf = jnp.pad(z_bf, ((0, B_pad - B), (0, 0)))

    def full_spec(shape):
        # Full-extent block: weights/biases resident in VMEM every grid step.
        # TODO(synk): could be single-buffered (pipeline_mode=pl.Buffered(1));
        # skipped here to keep lowering maximally portable — cost is ~0.6 MiB.
        return pl.BlockSpec(shape, lambda i: (0, 0))

    out = pl.pallas_call(
        generator_kernel,
        out_shape=jax.ShapeDtypeStruct((B_pad, OUT_PAD), jnp.bfloat16),
        grid_spec=pltpu.PrefetchScalarGridSpec(
            num_scalar_prefetch=0,
            grid=(n_blocks,),
            in_specs=[
                pl.BlockSpec((block_b, latent_dim), lambda i: (i, 0)),
                full_spec(w1b.shape), full_spec(b1f.shape),
                full_spec(w2b.shape), full_spec(b2f.shape),
                full_spec(w3b.shape), full_spec(b3f.shape),
                full_spec(w4b.shape), full_spec(b4p.shape),
            ],
            out_specs=pl.BlockSpec((block_b, OUT_PAD), lambda i: (i, 0)),
        ),
        compiler_params=pltpu.CompilerParams(
            dimension_semantics=("parallel",),
            # Kernel needs well under 8 MiB even at block_b=512; 32 MiB is
            # ample headroom and safe vs v7x's 64 MiB physical VMEM.
            vmem_limit_bytes=32 * 1024 * 1024,
        ),
    )(z_bf, w1b, b1f, w2b, b2f, w3b, b3f, w4b, b4p)

    if slice_output:
        return out[:B, :IMG_DIM]
    return out  # (B_pad, OUT_PAD); consumer slices/reshapes (fusable)


# --------------------------------------------------------------------------
# Init + pure-JAX reference
# --------------------------------------------------------------------------
def init_params(key, latent_dim):
    """Deterministic init mimicking nn.Linear default (uniform +/- 1/sqrt(fan_in)).
    Weights are stored transposed: (in_features, out_features); f32 masters."""
    dims = [latent_dim, 512, 256, 128, IMG_DIM]
    params = []
    for fan_in, fan_out in zip(dims[:-1], dims[1:]):
        key, kw, kb = jax.random.split(key, 3)
        bound = 1.0 / (fan_in ** 0.5)
        w = jax.random.uniform(kw, (fan_in, fan_out), jnp.float32, -bound, bound)
        b = jax.random.uniform(kb, (1, fan_out), jnp.float32, -bound, bound)
        params.append((w, b))
    return params


def reference_forward(z, params):
    """Pure-JAX reference emulating the kernel's bf16-input / f32-accumulate dots."""
    def dot_bf16(x, w):
        return jnp.dot(x.astype(jnp.bfloat16).astype(jnp.float32),
                       w.astype(jnp.bfloat16).astype(jnp.float32),
                       precision=jax.lax.Precision.HIGHEST)

    (w1, b1), (w2, b2), (w3, b3), (w4, b4) = params
    h = jnp.maximum(dot_bf16(z, w1) + b1, 0.0)
    h = jnp.maximum(dot_bf16(h, w2) + b2, 0.0)
    h = jnp.maximum(dot_bf16(h, w3) + b3, 0.0)
    h = jnp.tanh(dot_bf16(h, w4) + b4)
    return h.reshape(h.shape[0], -1)   # identity reshape, mirrors the module


if __name__ == "__main__":
    latent_dim = 32

    key = jax.random.PRNGKey(0)
    key, kz1, kz2 = jax.random.split(key, 3)
    params = init_params(key, latent_dim)
    prepared = jax.tree_util.tree_map(jnp.asarray, prepare_params(params))

    fwd = jax.jit(generator_forward,
                  static_argnames=("slice_output", "num_tc", "block_cap"))

    # Small-batch check (single 64-row tile).
    z_small = jax.random.normal(kz1, (8, latent_dim), jnp.float32)
    out_small = jax.block_until_ready(fwd(z_small, prepared))
    ref_small = reference_forward(z_small, params)
    assert out_small.shape == (8, IMG_DIM)
    assert out_small.dtype == jnp.bfloat16
    assert jnp.allclose(out_small.astype(jnp.float32), ref_small,
                        atol=2e-2, rtol=2e-2), "small-batch mismatch vs reference"

    # Non-divisible batch: exercises batch padding; single 256-row tile on
    # 1-TC chips, two 128-row tiles on v7x (both TensorCores active).
    z_big = jax.random.normal(kz2, (200, latent_dim), jnp.float32)
    out_big = jax.block_until_ready(fwd(z_big, prepared))
    ref_big = reference_forward(z_big, params)
    assert out_big.shape == (200, IMG_DIM)
    assert jnp.allclose(out_big.astype(jnp.float32), ref_big,
                        atol=2e-2, rtol=2e-2), "large-batch mismatch vs reference"

    print("KERNEL_OK")
</pallas_src>

<mosaic_0001>
module attributes {stable_mosaic.version = 11 : i64} {
  func.func @generator_kernel(%arg0: i32, %arg1: memref<64x32xbf16, #tpu.memory_space<vmem>>, %arg2: memref<32x512xbf16, #tpu.memory_space<vmem>>, %arg3: memref<1x512xf32, #tpu.memory_space<vmem>>, %arg4: memref<512x256xbf16, #tpu.memory_space<vmem>>, %arg5: memref<1x256xf32, #tpu.memory_space<vmem>>, %arg6: memref<256x128xbf16, #tpu.memory_space<vmem>>, %arg7: memref<1x128xf32, #tpu.memory_space<vmem>>, %arg8: memref<128x896xbf16, #tpu.memory_space<vmem>>, %arg9: memref<1x896xf32, #tpu.memory_space<vmem>>, %arg10: memref<64x896xbf16, #tpu.memory_space<vmem>>) attributes {dimension_semantics = [#tpu.dimension_semantics<parallel>], iteration_bounds = array<i64: 1>, scalar_prefetch = 0 : i64, scratch_operands = 0 : i64, tpu.core_type = #tpu.core_type<tc>, window_params = [{transform_indices = @transform_0, window_bounds = array<i64: 64, 32>}, {pipeline_mode = #tpu.pipeline_mode<synchronous>, transform_indices = @transform_1, window_bounds = array<i64: 32, 512>}, {pipeline_mode = #tpu.pipeline_mode<synchronous>, transform_indices = @transform_2, window_bounds = array<i64: 1, 512>}, {pipeline_mode = #tpu.pipeline_mode<synchronous>, transform_indices = @transform_3, window_bounds = array<i64: 512, 256>}, {pipeline_mode = #tpu.pipeline_mode<synchronous>, transform_indices = @transform_4, window_bounds = array<i64: 1, 256>}, {pipeline_mode = #tpu.pipeline_mode<synchronous>, transform_indices = @transform_5, window_bounds = array<i64: 256, 128>}, {pipeline_mode = #tpu.pipeline_mode<synchronous>, transform_indices = @transform_6, window_bounds = array<i64: 1, 128>}, {pipeline_mode = #tpu.pipeline_mode<synchronous>, transform_indices = @transform_7, window_bounds = array<i64: 128, 896>}, {pipeline_mode = #tpu.pipeline_mode<synchronous>, transform_indices = @transform_8, window_bounds = array<i64: 1, 896>}, {transform_indices = @transform_9, window_bounds = array<i64: 64, 896>}]} {
    %c0 = arith.constant 0 : index
    %c0_0 = arith.constant 0 : index
    %0 = vector.load %arg1[%c0, %c0_0] : memref<64x32xbf16, #tpu.memory_space<vmem>>, vector<64x32xbf16>
    %c0_1 = arith.constant 0 : index
    %c0_2 = arith.constant 0 : index
    %1 = vector.load %arg2[%c0_1, %c0_2] : memref<32x512xbf16, #tpu.memory_space<vmem>>, vector<32x512xbf16>
    %cst = arith.constant dense<0.000000e+00> : vector<64x512xf32>
    %2 = tpu.matmul %0, %1, %cst {dimension_numbers = #tpu.dot_dimension_numbers<[1], [0], [0], [1], [0, 0, 1, 1], [], []>} : vector<64x32xbf16>, vector<32x512xbf16>, vector<64x512xf32> -> vector<64x512xf32>
    %c0_3 = arith.constant 0 : index
    %c0_4 = arith.constant 0 : index
    %3 = vector.load %arg3[%c0_3, %c0_4] : memref<1x512xf32, #tpu.memory_space<vmem>>, vector<1x512xf32>
    %4 = vector.broadcast %3 : vector<1x512xf32> to vector<64x512xf32>
    %5 = arith.addf %2, %4 : vector<64x512xf32>
    %cst_5 = arith.constant 0.000000e+00 : f32
    %6 = vector.broadcast %cst_5 : f32 to vector<64x512xf32>
    %7 = arith.maximumf %5, %6 : vector<64x512xf32>
    %8 = arith.truncf %7 : vector<64x512xf32> to vector<64x512xbf16>
    %c0_6 = arith.constant 0 : index
    %c0_7 = arith.constant 0 : index
    %9 = vector.load %arg4[%c0_6, %c0_7] : memref<512x256xbf16, #tpu.memory_space<vmem>>, vector<512x256xbf16>
    %cst_8 = arith.constant dense<0.000000e+00> : vector<64x256xf32>
    %10 = tpu.matmul %8, %9, %cst_8 {dimension_numbers = #tpu.dot_dimension_numbers<[1], [0], [0], [1], [0, 0, 1, 1], [], []>} : vector<64x512xbf16>, vector<512x256xbf16>, vector<64x256xf32> -> vector<64x256xf32>
    %c0_9 = arith.constant 0 : index
    %c0_10 = arith.constant 0 : index
    %11 = vector.load %arg5[%c0_9, %c0_10] : memref<1x256xf32, #tpu.memory_space<vmem>>, vector<1x256xf32>
    %12 = vector.broadcast %11 : vector<1x256xf32> to vector<64x256xf32>
    %13 = arith.addf %10, %12 : vector<64x256xf32>
    %cst_11 = arith.constant 0.000000e+00 : f32
    %14 = vector.broadcast %cst_11 : f32 to vector<64x256xf32>
    %15 = arith.maximumf %13, %14 : vector<64x256xf32>
    %16 = arith.truncf %15 : vector<64x256xf32> to vector<64x256xbf16>
    %c0_12 = arith.constant 0 : index
    %c0_13 = arith.constant 0 : index
    %17 = vector.load %arg6[%c0_12, %c0_13] : memref<256x128xbf16, #tpu.memory_space<vmem>>, vector<256x128xbf16>
    %cst_14 = arith.constant dense<0.000000e+00> : vector<64x128xf32>
    %18 = tpu.matmul %16, %17, %cst_14 {dimension_numbers = #tpu.dot_dimension_numbers<[1], [0], [0], [1], [0, 0, 1, 1], [], []>} : vector<64x256xbf16>, vector<256x128xbf16>, vector<64x128xf32> -> vector<64x128xf32>
    %c0_15 = arith.constant 0 : index
    %c0_16 = arith.constant 0 : index
    %19 = vector.load %arg7[%c0_15, %c0_16] : memref<1x128xf32, #tpu.memory_space<vmem>>, vector<1x128xf32>
    %20 = vector.broadcast %19 : vector<1x128xf32> to vector<64x128xf32>
    %21 = arith.addf %18, %20 : vector<64x128xf32>
    %cst_17 = arith.constant 0.000000e+00 : f32
    %22 = vector.broadcast %cst_17 : f32 to vector<64x128xf32>
    %23 = arith.maximumf %21, %22 : vector<64x128xf32>
    %24 = arith.truncf %23 : vector<64x128xf32> to vector<64x128xbf16>
    %c0_18 = arith.constant 0 : index
    %c0_19 = arith.constant 0 : index
    %25 = vector.load %arg8[%c0_18, %c0_19] : memref<128x896xbf16, #tpu.memory_space<vmem>>, vector<128x896xbf16>
    %cst_20 = arith.constant dense<0.000000e+00> : vector<64x896xf32>
    %26 = tpu.matmul %24, %25, %cst_20 {dimension_numbers = #tpu.dot_dimension_numbers<[1], [0], [0], [1], [0, 0, 1, 1], [], []>} : vector<64x128xbf16>, vector<128x896xbf16>, vector<64x896xf32> -> vector<64x896xf32>
    %c0_21 = arith.constant 0 : index
    %c0_22 = arith.constant 0 : index
    %27 = vector.load %arg9[%c0_21, %c0_22] : memref<1x896xf32, #tpu.memory_space<vmem>>, vector<1x896xf32>
    %28 = vector.broadcast %27 : vector<1x896xf32> to vector<64x896xf32>
    %29 = arith.addf %26, %28 : vector<64x896xf32>
    %30 = math.tanh %29 : vector<64x896xf32>
    %31 = arith.truncf %30 : vector<64x896xf32> to vector<64x896xbf16>
    %c0_23 = arith.constant 0 : index
    %c0_24 = arith.constant 0 : index
    %32 = vector.load %arg10[%c0_23, %c0_24] : memref<64x896xbf16, #tpu.memory_space<vmem>>, vector<64x896xbf16>
    tpu.vector_store %arg10[%c0_23, %c0_24], %31 {strides = array<i32>} : memref<64x896xbf16, #tpu.memory_space<vmem>>, vector<64x896xbf16>,
    return
  }
  func.func @transform_0(%arg0: i32) -> (i32, i32) {
    %c0_i32 = arith.constant 0 : i32
    %c0_i32_0 = arith.constant 0 : i32
    return %arg0, %c0_i32 : i32, i32
  }
  func.func @transform_1(%arg0: i32) -> (i32, i32) {
    %c0_i32 = arith.constant 0 : i32
    %c0_i32_0 = arith.constant 0 : i32
    %c0_i32_1 = arith.constant 0 : i32
    return %c0_i32, %c0_i32_0 : i32, i32
  }
  func.func @transform_2(%arg0: i32) -> (i32, i32) {
    %c0_i32 = arith.constant 0 : i32
    %c0_i32_0 = arith.constant 0 : i32
    %c0_i32_1 = arith.constant 0 : i32
    return %c0_i32, %c0_i32_0 : i32, i32
  }
  func.func @transform_3(%arg0: i32) -> (i32, i32) {
    %c0_i32 = arith.constant 0 : i32
    %c0_i32_0 = arith.constant 0 : i32
    %c0_i32_1 = arith.constant 0 : i32
    return %c0_i32, %c0_i32_0 : i32, i32
  }
  func.func @transform_4(%arg0: i32) -> (i32, i32) {
    %c0_i32 = arith.constant 0 : i32
    %c0_i32_0 = arith.constant 0 : i32
    %c0_i32_1 = arith.constant 0 : i32
    return %c0_i32, %c0_i32_0 : i32, i32
  }
  func.func @transform_5(%arg0: i32) -> (i32, i32) {
    %c0_i32 = arith.constant 0 : i32
    %c0_i32_0 = arith.constant 0 : i32
    %c0_i32_1 = arith.constant 0 : i32
    return %c0_i32, %c0_i32_0 : i32, i32
  }
  func.func @transform_6(%arg0: i32) -> (i32, i32) {
    %c0_i32 = arith.constant 0 : i32
    %c0_i32_0 = arith.constant 0 : i32
    %c0_i32_1 = arith.constant 0 : i32
    return %c0_i32, %c0_i32_0 : i32, i32
  }
  func.func @transform_7(%arg0: i32) -> (i32, i32) {
    %c0_i32 = arith.constant 0 : i32
    %c0_i32_0 = arith.constant 0 : i32
    %c0_i32_1 = arith.constant 0 : i32
    return %c0_i32, %c0_i32_0 : i32, i32
  }
  func.func @transform_8(%arg0: i32) -> (i32, i32) {
    %c0_i32 = arith.constant 0 : i32
    %c0_i32_0 = arith.constant 0 : i32
    %c0_i32_1 = arith.constant 0 : i32
    return %c0_i32, %c0_i32_0 : i32, i32
  }
  func.func @transform_9(%arg0: i32) -> (i32, i32) {
    %c0_i32 = arith.constant 0 : i32
    %c0_i32_0 = arith.constant 0 : i32
    return %arg0, %c0_i32 : i32, i32
  }
}

</mosaic_0001>

<llo_original>
// kernel: generator_forward.1
$region0: #{generator_forward.1}
  #allocation0 [shape = 'u32[]', space=smem, size = 0x4, offset = 0x4, fixed_abs, tag = 'smem constant byte address 0x4 - core index']
  #allocation1 [shape = 'u32[72,128]{1,0:T(1,128)}', space=vmem, size = 0x9000, scoped, tag = 'internal scratch']
  %s0 = inlined_call_operand.vmem [shape: bf16[64,32], index: 0, kind: input, shape index: {}]
  %s1 = inlined_call_operand.hbm [shape: bf16[32,512], index: 1, kind: input, shape index: {}]
  %s2 = inlined_call_operand.vmem [shape: f32[1,512], index: 2, kind: input, shape index: {}]
  %s3 = inlined_call_operand.hbm [shape: bf16[512,256], index: 3, kind: input, shape index: {}]
  %s4 = inlined_call_operand.vmem [shape: f32[1,256], index: 4, kind: input, shape index: {}]
  %s5 = inlined_call_operand.hbm [shape: bf16[256,128], index: 5, kind: input, shape index: {}]
  %s6 = inlined_call_operand.vmem [shape: f32[1,128], index: 6, kind: input, shape index: {}]
  %s7 = inlined_call_operand.hbm [shape: bf16[128,896], index: 7, kind: input, shape index: {}]
  %s8 = inlined_call_operand.vmem [shape: f32[1,896], index: 8, kind: input, shape index: {}]
  %s9 = inlined_call_operand.vmem [shape: bf16[64,896], index: 9, kind: output, shape index: {}]
  %s10 = sld [smem:[#allocation0]]
  $region62: #{generator_forward.1} parent=0
    _
  %s12 = ssub.s32 1, %s10
  %s13 = scalar_select 0, %s12, %s10
  $region1: #{generator_forward.1} parent=0
    #allocation2 [shape = 'u8[32768]{0}', space=vmem, size = 0x8000, scoped, tag = 'input window, operand 1, single buffered']
    #allocation3 [shape = 's32[1]{0}', space=sflag, size = 0x4, scoped, tag = 'scoped memory for generator_forward.1']
    #allocation4 [shape = 'u8[262144]{0}', space=vmem, size = 0x40000, scoped, tag = 'input window, operand 3, single buffered']
    #allocation5 [shape = 's32[1]{0}', space=sflag, size = 0x4, scoped, tag = 'scoped memory for generator_forward.1']
    #allocation6 [shape = 'u8[65536]{0}', space=vmem, size = 0x10000, scoped, tag = 'input window, operand 5, single buffered']
    #allocation7 [shape = 'u8[229376]{0}', space=vmem, size = 0x38000, scoped, tag = 'input window, operand 7, single buffered']
    #allocation8 [shape = 's32[1]{0}', space=sflag, size = 0x4, scoped, tag = 'scoped memory for generator_forward.1']
    %14 = vsyncpa [#allocation3], 0
    %15 = vsyncpa [#allocation5], 0
    %16 = vsyncpa [#allocation8], 0
    // Predicated region
    $region2: #{generator_forward.1} parent=1 // pred_check
      _
    $region3: #{generator_forward.1} parent=1 // pred_check_branch
      %18 = sbr.rel (0) target = $region5
    $region4: #{generator_forward.1} parent=1 // pred_region
      _
    $region5: #{generator_forward.1} parent=1 // pred_fallthru
      _
    // Predicated region
    $region6: #{generator_forward.1} parent=1 // pred_check
      _
    $region7: #{generator_forward.1} parent=1 // pred_check_branch
      %20 = sbr.rel (0) target = $region9
    $region8: #{generator_forward.1} parent=1 // pred_region
      %22 = vsyncadd [#allocation3], 0
      %s23 = sshll.u32 %s1, 4
      %s24 = int_to_ptr.hbm [resolvable:$true] %s23
      %s25 = sshll.u32 [#allocation2], 4
      %s26 = int_to_ptr.vmem [resolvable:$true] %s25
      %31 = dma.hbm_to_vmem [thread:$0]  %s24, 1024, %s26, [#allocation3], 256, 256, 16
    $region9: #{generator_forward.1} parent=1 // pred_fallthru
      _
    // Predicated region
    $region10: #{generator_forward.1} parent=1 // pred_check
      _
    $region11: #{generator_forward.1} parent=1 // pred_check_branch
      %33 = sbr.rel (0) target = $region13
    $region12: #{generator_forward.1} parent=1 // pred_region
      _
    $region13: #{generator_forward.1} parent=1 // pred_fallthru
      _
    // Predicated region
    $region14: #{generator_forward.1} parent=1 // pred_check
      _
    $region15: #{generator_forward.1} parent=1 // pred_check_branch
      %35 = sbr.rel (0) target = $region17
    $region16: #{generator_forward.1} parent=1 // pred_region
      %37 = vsyncadd [#allocation5], 0
      %s38 = sshll.u32 %s3, 4
      %s39 = int_to_ptr.hbm [resolvable:$true] %s38
      %s40 = sshll.u32 [#allocation4], 4
      %s41 = int_to_ptr.vmem [resolvable:$true] %s40
      %46 = dma.hbm_to_vmem [thread:$0]  %s39, 8192, %s41, [#allocation5], 128, 128, 8
    $region17: #{generator_forward.1} parent=1 // pred_fallthru
      _
    // Predicated region
    $region18: #{generator_forward.1} parent=1 // pred_check
      _
    $region19: #{generator_forward.1} parent=1 // pred_check_branch
      %48 = sbr.rel (0) target = $region21
    $region20: #{generator_forward.1} parent=1 // pred_region
      _
    $region21: #{generator_forward.1} parent=1 // pred_fallthru
      _
    // Predicated region
    $region22: #{generator_forward.1} parent=1 // pred_check
      _
    $region23: #{generator_forward.1} parent=1 // pred_check_branch
      %50 = sbr.rel (0) target = $region25
    $region24: #{generator_forward.1} parent=1 // pred_region
      %52 = vsyncadd [#allocation5], 0
      %s53 = sshll.u32 %s5, 4
      %s54 = int_to_ptr.hbm [resolvable:$true] %s53
      %s55 = sshll.u32 [#allocation6], 4
      %s56 = int_to_ptr.vmem [resolvable:$true] %s55
      %61 = dma.hbm_to_vmem [thread:$0]  %s54, 2048, %s56, [#allocation5], 64, 64, 4
    $region25: #{generator_forward.1} parent=1 // pred_fallthru
      _
    // Predicated region
    $region26: #{generator_forward.1} parent=1 // pred_check
      _
    $region27: #{generator_forward.1} parent=1 // pred_check_branch
      %63 = sbr.rel (0) target = $region29
    $region28: #{generator_forward.1} parent=1 // pred_region
      _
    $region29: #{generator_forward.1} parent=1 // pred_fallthru
      _
    // Predicated region
    $region30: #{generator_forward.1} parent=1 // pred_check
      _
    $region31: #{generator_forward.1} parent=1 // pred_check_branch
      %65 = sbr.rel (0) target = $region33
    $region32: #{generator_forward.1} parent=1 // pred_region
      %67 = vsyncadd [#allocation8], 0
      %s68 = sshll.u32 %s7, 4
      %s69 = int_to_ptr.hbm [resolvable:$true] %s68
      %s70 = sshll.u32 [#allocation7], 4
      %s71 = int_to_ptr.vmem [resolvable:$true] %s70
      %76 = dma.hbm_to_vmem [thread:$0]  %s69, 7168, %s71, [#allocation8], 448, 448, 28
    $region33: #{generator_forward.1} parent=1 // pred_fallthru
      _
    // Predicated region
    $region34: #{generator_forward.1} parent=1 // pred_check
      _
    $region35: #{generator_forward.1} parent=1 // pred_check_branch
      %78 = sbr.rel (0) target = $region37
    $region36: #{generator_forward.1} parent=1 // pred_region
      _
    $region37: #{generator_forward.1} parent=1 // pred_fallthru
      _
    // Predicated region
    $region38: #{generator_forward.1} parent=1 // pred_check
      _
    $region39: #{generator_forward.1} parent=1 // pred_check_branch
      %80 = sbr.rel (0) target = $region41
    $region40: #{generator_forward.1} parent=1 // pred_region
      %82 = dma.done [#allocation3], 1024
    $region41: #{generator_forward.1} parent=1 // pred_fallthru
      _
    // Predicated region
    $region42: #{generator_forward.1} parent=1 // pred_check
      _
    $region43: #{generator_forward.1} parent=1 // pred_check_branch
      %84 = sbr.rel (0) target = $region45
    $region44: #{generator_forward.1} parent=1 // pred_region
      %86 = dma.done [#allocation5], 8192
    $region45: #{generator_forward.1} parent=1 // pred_fallthru
      _
    // Predicated region
    $region46: #{generator_forward.1} parent=1 // pred_check
      _
    $region47: #{generator_forward.1} parent=1 // pred_check_branch
      %88 = sbr.rel (0) target = $region49
    $region48: #{generator_forward.1} parent=1 // pred_region
      %90 = dma.done [#allocation5], 2048
    $region49: #{generator_forward.1} parent=1 // pred_fallthru
      _
    // Predicated region
    $region50: #{generator_forward.1} parent=1 // pred_check
      _
    $region51: #{generator_forward.1} parent=1 // pred_check_branch
      %92 = sbr.rel (0) target = $region53
    $region52: #{generator_forward.1} parent=1 // pred_region
      %94 = dma.done [#allocation8], 7168
    $region53: #{generator_forward.1} parent=1 // pred_fallthru
      _
    %v96 = vld [vmem:[%s0] sm:$0xf]
    %v97 = vld [vmem:[%s0 + $0x4] sm:$0xf]
    %v98 = vld [vmem:[%s0 + $0x8] sm:$0xf]
    %v99 = vld [vmem:[%s0 + $0xc] sm:$0xf]
    %v100 = vld [vmem:[%s0 + $0x10] sm:$0xf]
    %v101 = vld [vmem:[%s0 + $0x14] sm:$0xf]
    %v102 = vld [vmem:[%s0 + $0x18] sm:$0xf]
    %v103 = vld [vmem:[%s0 + $0x1c] sm:$0xf]
    %v104 = vld [vmem:[#allocation2] sm:$0xff]
    %v105 = vld [vmem:[#allocation2 + $0x8] sm:$0xff]
    %v106 = vld [vmem:[#allocation2 + $0x10] sm:$0xff]
    %v107 = vld [vmem:[#allocation2 + $0x18] sm:$0xff]
    %v108 = vld [vmem:[#allocation2 + $0x20] sm:$0xff]
    %v109 = vld [vmem:[#allocation2 + $0x28] sm:$0xff]
    %v110 = vld [vmem:[#allocation2 + $0x30] sm:$0xff]
    %v111 = vld [vmem:[#allocation2 + $0x38] sm:$0xff]
    %v112 = vld [vmem:[%s2] sm:$0xf]
    %v114 = vperm.slane %v112, 0
    %v115 = vperm.slane %v112, 1
    %v116 = vperm.slane %v112, 2
    %v117 = vperm.slane %v112, 3
    %v130 = vunpack.c.l.b16 %v96
    %v131 = vunpack.c.l.b16 %v97
    %v132 = vunpack.c.l.b16 %v98
    %v133 = vunpack.c.l.b16 %v99
    %v134 = vunpack.c.l.b16 %v100
    %v135 = vunpack.c.l.b16 %v101
    %v136 = vunpack.c.l.b16 %v102
    %v137 = vunpack.c.l.b16 %v103
    %v138 = vpack.c.b16 %v131, %v130
    %v139 = vpack.c.b16 %v133, %v132
    %v140 = vpack.c.b16 %v135, %v134
    %v141 = vpack.c.b16 %v137, %v136
    %v150 = vunpack.c.l.b16 %v104
    %v151 = vunpack.c.h.b16 %v104
    %v152 = vunpack.c.l.b16 %v105
    %v153 = vunpack.c.h.b16 %v105
    %v154 = vunpack.c.l.b16 %v106
    %v155 = vunpack.c.h.b16 %v106
    %v156 = vunpack.c.l.b16 %v107
    %v157 = vunpack.c.h.b16 %v107
    %v158 = vunpack.c.l.b16 %v108
    %v159 = vunpack.c.h.b16 %v108
    %v160 = vunpack.c.l.b16 %v109
    %v161 = vunpack.c.h.b16 %v109
    %v162 = vunpack.c.l.b16 %v110
    %v163 = vunpack.c.h.b16 %v110
    %v164 = vunpack.c.l.b16 %v111
    %v165 = vunpack.c.h.b16 %v111
    %v166 = vpack.c.b16 %v154, %v150
    %v167 = vpack.c.b16 %v155, %v151
    %v168 = vpack.c.b16 %v156, %v152
    %v169 = vpack.c.b16 %v157, %v153
    %v170 = vpack.c.b16 %v162, %v158
    %v171 = vpack.c.b16 %v163, %v159
    %v172 = vpack.c.b16 %v164, %v160
    %v173 = vpack.c.b16 %v165, %v161
    %vm182 = vcmask 261120
    %v184 = vsel %vm182, %v138, 0
    %v187 = vsel %vm182, %v139, 0
    %v190 = vsel %vm182, %v140, 0
    %v193 = vsel %vm182, %v141, 0
    %195 = vmatpush.bf16.msra.mxu0 0
    %196 = vmatpush.bf16.msra.mxu0 0
    %197 = vmatpush.bf16.msra.mxu0 0
    %198 = vmatpush.bf16.msra.mxu0 0
    %199 = vmatpush.bf16.msra.mxu0 0
    %200 = vmatpush.bf16.msra.mxu0 0
    %201 = vmatpush.bf16.msra.mxu0 %v170
    %202 = vmatpush.bf16.msra.mxu0 %v166
    %203 = vmatmul.bf16.gmra.mxu0 %v184
    %v204 = vpop.f32.mrf.mxu0
    %v205 = vadd.f32 %v114, %v204
    %v206 = vpop.f32.mrf.mxu0
    %v207 = vadd.f32 %v114, %v206
    %208 = vmatmul.bf16.gmra.mxu0 %v187
    %v209 = vpop.f32.mrf.mxu0
    %v210 = vadd.f32 %v114, %v209
    %v211 = vpop.f32.mrf.mxu0
    %v212 = vadd.f32 %v114, %v211
    %213 = vmatmul.bf16.gmra.mxu0 %v190
    %v214 = vpop.f32.mrf.mxu0
    %v215 = vadd.f32 %v114, %v214
    %v216 = vpop.f32.mrf.mxu0
    %v217 = vadd.f32 %v114, %v216
    %218 = vmatmul.bf16.gmra.mxu0 %v193
    %v219 = vpop.f32.mrf.mxu0
    %v220 = vadd.f32 %v114, %v219
    %v221 = vpop.f32.mrf.mxu0
    %v222 = vadd.f32 %v114, %v221
    %223 = vdwg.mxu0
    %224 = vmatpush.bf16.msra.mxu0 0
    %225 = vmatpush.bf16.msra.mxu0 0
    %226 = vmatpush.bf16.msra.mxu0 0
    %227 = vmatpush.bf16.msra.mxu0 0
    %228 = vmatpush.bf16.msra.mxu0 0
    %229 = vmatpush.bf16.msra.mxu0 0
    %230 = vmatpush.bf16.msra.mxu0 %v171
    %231 = vmatpush.bf16.msra.mxu0 %v167
    %232 = vmatmul.bf16.gmra.mxu0 %v184
    %v233 = vpop.f32.mrf.mxu0
    %v234 = vadd.f32 %v115, %v233
    %v235 = vpop.f32.mrf.mxu0
    %v236 = vadd.f32 %v115, %v235
    %237 = vmatmul.bf16.gmra.mxu0 %v187
    %v238 = vpop.f32.mrf.mxu0
    %v239 = vadd.f32 %v115, %v238
    %v240 = vpop.f32.mrf.mxu0
    %v241 = vadd.f32 %v115, %v240
    %242 = vmatmul.bf16.gmra.mxu0 %v190
    %v243 = vpop.f32.mrf.mxu0
    %v244 = vadd.f32 %v115, %v243
    %v245 = vpop.f32.mrf.mxu0
    %v246 = vadd.f32 %v115, %v245
    %247 = vmatmul.bf16.gmra.mxu0 %v193
    %v248 = vpop.f32.mrf.mxu0
    %v249 = vadd.f32 %v115, %v248
    %v250 = vpop.f32.mrf.mxu0
    %v251 = vadd.f32 %v115, %v250
    %252 = vdwg.mxu0
    %253 = vmatpush.bf16.msra.mxu0 0
    %254 = vmatpush.bf16.msra.mxu0 0
    %255 = vmatpush.bf16.msra.mxu0 0
    %256 = vmatpush.bf16.msra.mxu0 0
    %257 = vmatpush.bf16.msra.mxu0 0
    %258 = vmatpush.bf16.msra.mxu0 0
    %259 = vmatpush.bf16.msra.mxu0 %v172
    %260 = vmatpush.bf16.msra.mxu0 %v168
    %261 = vmatmul.bf16.gmra.mxu0 %v184
    %v262 = vpop.f32.mrf.mxu0
    %v263 = vadd.f32 %v116, %v262
    %v264 = vpop.f32.mrf.mxu0
    %v265 = vadd.f32 %v116, %v264
    %266 = vmatmul.bf16.gmra.mxu0 %v187
    %v267 = vpop.f32.mrf.mxu0
    %v268 = vadd.f32 %v116, %v267
    %v269 = vpop.f32.mrf.mxu0
    %v270 = vadd.f32 %v116, %v269
    %271 = vmatmul.bf16.gmra.mxu0 %v190
    %v272 = vpop.f32.mrf.mxu0
    %v273 = vadd.f32 %v116, %v272
    %v274 = vpop.f32.mrf.mxu0
    %v275 = vadd.f32 %v116, %v274
    %276 = vmatmul.bf16.gmra.mxu0 %v193
    %v277 = vpop.f32.mrf.mxu0
    %v278 = vadd.f32 %v116, %v277
    %v279 = vpop.f32.mrf.mxu0
    %v280 = vadd.f32 %v116, %v279
    %281 = vdwg.mxu0
    %282 = vmatpush.bf16.msra.mxu0 0
    %283 = vmatpush.bf16.msra.mxu0 0
    %284 = vmatpush.bf16.msra.mxu0 0
    %285 = vmatpush.bf16.msra.mxu0 0
    %286 = vmatpush.bf16.msra.mxu0 0
    %287 = vmatpush.bf16.msra.mxu0 0
    %288 = vmatpush.bf16.msra.mxu0 %v173
    %289 = vmatpush.bf16.msra.mxu0 %v169
    %290 = vmatmul.bf16.gmra.mxu0 %v184
    %v291 = vpop.f32.mrf.mxu0
    %v292 = vadd.f32 %v117, %v291
    %v293 = vpop.f32.mrf.mxu0
    %v294 = vadd.f32 %v117, %v293
    %295 = vmatmul.bf16.gmra.mxu0 %v187
    %v296 = vpop.f32.mrf.mxu0
    %v297 = vadd.f32 %v117, %v296
    %v298 = vpop.f32.mrf.mxu0
    %v299 = vadd.f32 %v117, %v298
    %300 = vmatmul.bf16.gmra.mxu0 %v190
    %v301 = vpop.f32.mrf.mxu0
    %v302 = vadd.f32 %v117, %v301
    %v303 = vpop.f32.mrf.mxu0
    %v304 = vadd.f32 %v117, %v303
    %305 = vmatmul.bf16.gmra.mxu0 %v193
    %v306 = vpop.f32.mrf.mxu0
    %v307 = vadd.f32 %v117, %v306
    %v308 = vpop.f32.mrf.mxu0
    %v309 = vadd.f32 %v117, %v308
    %310 = vdwg.mxu0
    %v311 = vmax.f32 %v205, 0.0
    %v312 = vmax.f32 %v234, 0.0
    %v313 = vmax.f32 %v263, 0.0
    %v314 = vmax.f32 %v292, 0.0
    %v315 = vmax.f32 %v207, 0.0
    %v316 = vmax.f32 %v236, 0.0
    %v317 = vmax.f32 %v265, 0.0
    %v318 = vmax.f32 %v294, 0.0
    %v319 = vmax.f32 %v210, 0.0
    %v320 = vmax.f32 %v239, 0.0
    %v321 = vmax.f32 %v268, 0.0
    %v322 = vmax.f32 %v297, 0.0
    %v323 = vmax.f32 %v212, 0.0
    %v324 = vmax.f32 %v241, 0.0
    %v325 = vmax.f32 %v270, 0.0
    %v326 = vmax.f32 %v299, 0.0
    %v327 = vmax.f32 %v215, 0.0
    %v328 = vmax.f32 %v244, 0.0
    %v329 = vmax.f32 %v273, 0.0
    %v330 = vmax.f32 %v302, 0.0
    %v331 = vmax.f32 %v217, 0.0
    %v332 = vmax.f32 %v246, 0.0
    %v333 = vmax.f32 %v275, 0.0
    %v334 = vmax.f32 %v304, 0.0
    %v335 = vmax.f32 %v220, 0.0
    %v336 = vmax.f32 %v249, 0.0
    %v337 = vmax.f32 %v278, 0.0
    %v338 = vmax.f32 %v307, 0.0
    %v339 = vmax.f32 %v222, 0.0
    %v340 = vmax.f32 %v251, 0.0
    %v341 = vmax.f32 %v280, 0.0
    %v342 = vmax.f32 %v309, 0.0
    %v343 = vpack.c.bf16 %v315, %v311
    %v344 = vpack.c.bf16 %v316, %v312
    %v345 = vpack.c.bf16 %v317, %v313
    %v346 = vpack.c.bf16 %v318, %v314
    %v347 = vpack.c.bf16 %v323, %v319
    %v348 = vpack.c.bf16 %v324, %v320
    %v349 = vpack.c.bf16 %v325, %v321
    %v350 = vpack.c.bf16 %v326, %v322
    %v351 = vpack.c.bf16 %v331, %v327
    %v352 = vpack.c.bf16 %v332, %v328
    %v353 = vpack.c.bf16 %v333, %v329
    %v354 = vpack.c.bf16 %v334, %v330
    %v355 = vpack.c.bf16 %v339, %v335
    %v356 = vpack.c.bf16 %v340, %v336
    %v357 = vpack.c.bf16 %v341, %v337
    %v358 = vpack.c.bf16 %v342, %v338
    %v359 = vld [vmem:[#allocation4] sm:$0xff]
    %v360 = vld [vmem:[#allocation4 + $0x8] sm:$0xff]
    %v361 = vld [vmem:[#allocation4 + $0x10] sm:$0xff]
    %v362 = vld [vmem:[#allocation4 + $0x18] sm:$0xff]
    %v363 = vld [vmem:[#allocation4 + $0x20] sm:$0xff]
    %v364 = vld [vmem:[#allocation4 + $0x28] sm:$0xff]
    %v365 = vld [vmem:[#allocation4 + $0x30] sm:$0xff]
    %v366 = vld [vmem:[#allocation4 + $0x38] sm:$0xff]
    %v367 = vld [vmem:[#allocation4 + $0x40] sm:$0xff]
    %v368 = vld [vmem:[#allocation4 + $0x48] sm:$0xff]
    %v369 = vld [vmem:[#allocation4 + $0x50] sm:$0xff]
    %v370 = vld [vmem:[#allocation4 + $0x58] sm:$0xff]
    %v371 = vld [vmem:[#allocation4 + $0x60] sm:$0xff]
    %v372 = vld [vmem:[#allocation4 + $0x68] sm:$0xff]
    %v373 = vld [vmem:[#allocation4 + $0x70] sm:$0xff]
    %v374 = vld [vmem:[#allocation4 + $0x78] sm:$0xff]
    %v375 = vld [vmem:[#allocation4 + $0x80] sm:$0xff]
    %v376 = vld [vmem:[#allocation4 + $0x88] sm:$0xff]
    %v377 = vld [vmem:[#allocation4 + $0x90] sm:$0xff]
    %v378 = vld [vmem:[#allocation4 + $0x98] sm:$0xff]
    %v379 = vld [vmem:[#allocation4 + $0xa0] sm:$0xff]
    %v380 = vld [vmem:[#allocation4 + $0xa8] sm:$0xff]
    %v381 = vld [vmem:[#allocation4 + $0xb0] sm:$0xff]
    %v382 = vld [vmem:[#allocation4 + $0xb8] sm:$0xff]
    %v383 = vld [vmem:[#allocation4 + $0xc0] sm:$0xff]
    %v384 = vld [vmem:[#allocation4 + $0xc8] sm:$0xff]
    %v385 = vld [vmem:[#allocation4 + $0xd0] sm:$0xff]
    %v386 = vld [vmem:[#allocation4 + $0xd8] sm:$0xff]
    %v387 = vld [vmem:[#allocation4 + $0xe0] sm:$0xff]
    %v388 = vld [vmem:[#allocation4 + $0xe8] sm:$0xff]
    %v389 = vld [vmem:[#allocation4 + $0xf0] sm:$0xff]
    %v390 = vld [vmem:[#allocation4 + $0xf8] sm:$0xff]
    %v391 = vld [vmem:[#allocation4 + $0x100] sm:$0xff]
    %v392 = vld [vmem:[#allocation4 + $0x108] sm:$0xff]
    %v393 = vld [vmem:[#allocation4 + $0x110] sm:$0xff]
    %v394 = vld [vmem:[#allocation4 + $0x118] sm:$0xff]
    %v395 = vld [vmem:[#allocation4 + $0x120] sm:$0xff]
    %v396 = vld [vmem:[#allocation4 + $0x128] sm:$0xff]
    %v397 = vld [vmem:[#allocation4 + $0x130] sm:$0xff]
    %v398 = vld [vmem:[#allocation4 + $0x138] sm:$0xff]
    %v399 = vld [vmem:[#allocation4 + $0x140] sm:$0xff]
    %v400 = vld [vmem:[#allocation4 + $0x148] sm:$0xff]
    %v401 = vld [vmem:[#allocation4 + $0x150] sm:$0xff]
    %v402 = vld [vmem:[#allocation4 + $0x158] sm:$0xff]
    %v403 = vld [vmem:[#allocation4 + $0x160] sm:$0xff]
    %v404 = vld [vmem:[#allocation4 + $0x168] sm:$0xff]
    %v405 = vld [vmem:[#allocation4 + $0x170] sm:$0xff]
    %v406 = vld [vmem:[#allocation4 + $0x178] sm:$0xff]
    %v407 = vld [vmem:[#allocation4 + $0x180] sm:$0xff]
    %v408 = vld [vmem:[#allocation4 + $0x188] sm:$0xff]
    %v409 = vld [vmem:[#allocation4 + $0x190] sm:$0xff]
    %v410 = vld [vmem:[#allocation4 + $0x198] sm:$0xff]
    %v411 = vld [vmem:[#allocation4 + $0x1a0] sm:$0xff]
    %v412 = vld [vmem:[#allocation4 + $0x1a8] sm:$0xff]
    %v413 = vld [vmem:[#allocation4 + $0x1b0] sm:$0xff]
    %v414 = vld [vmem:[#allocation4 + $0x1b8] sm:$0xff]
    %v415 = vld [vmem:[#allocation4 + $0x1c0] sm:$0xff]
    %v416 = vld [vmem:[#allocation4 + $0x1c8] sm:$0xff]
    %v417 = vld [vmem:[#allocation4 + $0x1d0] sm:$0xff]
    %v418 = vld [vmem:[#allocation4 + $0x1d8] sm:$0xff]
    %v419 = vld [vmem:[#allocation4 + $0x1e0] sm:$0xff]
    %v420 = vld [vmem:[#allocation4 + $0x1e8] sm:$0xff]
    %v421 = vld [vmem:[#allocation4 + $0x1f0] sm:$0xff]
    %v422 = vld [vmem:[#allocation4 + $0x1f8] sm:$0xff]
    %v423 = vld [vmem:[%s4] sm:$0x3]
    %v425 = vperm.slane %v423, 0
    %v426 = vperm.slane %v423, 1
    %v493 = vunpack.c.l.b16 %v359
    %v494 = vunpack.c.h.b16 %v359
    %v495 = vunpack.c.l.b16 %v360
    %v496 = vunpack.c.h.b16 %v360
    %v497 = vunpack.c.l.b16 %v361
    %v498 = vunpack.c.h.b16 %v361
    %v499 = vunpack.c.l.b16 %v362
    %v500 = vunpack.c.h.b16 %v362
    %v501 = vunpack.c.l.b16 %v363
    %v502 = vunpack.c.h.b16 %v363
    %v503 = vunpack.c.l.b16 %v364
    %v504 = vunpack.c.h.b16 %v364
    %v505 = vunpack.c.l.b16 %v365
    %v506 = vunpack.c.h.b16 %v365
    %v507 = vunpack.c.l.b16 %v366
    %v508 = vunpack.c.h.b16 %v366
    %v509 = vunpack.c.l.b16 %v367
    %v510 = vunpack.c.h.b16 %v367
    %v511 = vunpack.c.l.b16 %v368
    %v512 = vunpack.c.h.b16 %v368
    %v513 = vunpack.c.l.b16 %v369
    %v514 = vunpack.c.h.b16 %v369
    %v515 = vunpack.c.l.b16 %v370
    %v516 = vunpack.c.h.b16 %v370
    %v517 = vunpack.c.l.b16 %v371
    %v518 = vunpack.c.h.b16 %v371
    %v519 = vunpack.c.l.b16 %v372
    %v520 = vunpack.c.h.b16 %v372
    %v521 = vunpack.c.l.b16 %v373
    %v522 = vunpack.c.h.b16 %v373
    %v523 = vunpack.c.l.b16 %v374
    %v524 = vunpack.c.h.b16 %v374
    %v525 = vunpack.c.l.b16 %v375
    %v526 = vunpack.c.h.b16 %v375
    %v527 = vunpack.c.l.b16 %v376
    %v528 = vunpack.c.h.b16 %v376
    %v529 = vunpack.c.l.b16 %v377
    %v530 = vunpack.c.h.b16 %v377
    %v531 = vunpack.c.l.b16 %v378
    %v532 = vunpack.c.h.b16 %v378
    %v533 = vunpack.c.l.b16 %v379
    %v534 = vunpack.c.h.b16 %v379
    %v535 = vunpack.c.l.b16 %v380
    %v536 = vunpack.c.h.b16 %v380
    %v537 = vunpack.c.l.b16 %v381
    %v538 = vunpack.c.h.b16 %v381
    %v539 = vunpack.c.l.b16 %v382
    %v540 = vunpack.c.h.b16 %v382
    %v541 = vunpack.c.l.b16 %v383
    %v542 = vunpack.c.h.b16 %v383
    %v543 = vunpack.c.l.b16 %v384
    %v544 = vunpack.c.h.b16 %v384
    %v545 = vunpack.c.l.b16 %v385
    %v546 = vunpack.c.h.b16 %v385
    %v547 = vunpack.c.l.b16 %v386
    %v548 = vunpack.c.h.b16 %v386
    %v549 = vunpack.c.l.b16 %v387
    %v550 = vunpack.c.h.b16 %v387
    %v551 = vunpack.c.l.b16 %v388
    %v552 = vunpack.c.h.b16 %v388
    %v553 = vunpack.c.l.b16 %v389
    %v554 = vunpack.c.h.b16 %v389
    %v555 = vunpack.c.l.b16 %v390
    %v556 = vunpack.c.h.b16 %v390
    %v557 = vunpack.c.l.b16 %v391
    %v558 = vunpack.c.h.b16 %v391
    %v559 = vunpack.c.l.b16 %v392
    %v560 = vunpack.c.h.b16 %v392
    %v561 = vunpack.c.l.b16 %v393
    %v562 = vunpack.c.h.b16 %v393
    %v563 = vunpack.c.l.b16 %v394
    %v564 = vunpack.c.h.b16 %v394
    %v565 = vunpack.c.l.b16 %v395
    %v566 = vunpack.c.h.b16 %v395
    %v567 = vunpack.c.l.b16 %v396
    %v568 = vunpack.c.h.b16 %v396
    %v569 = vunpack.c.l.b16 %v397
    %v570 = vunpack.c.h.b16 %v397
    %v571 = vunpack.c.l.b16 %v398
    %v572 = vunpack.c.h.b16 %v398
    %v573 = vunpack.c.l.b16 %v399
    %v574 = vunpack.c.h.b16 %v399
    %v575 = vunpack.c.l.b16 %v400
    %v576 = vunpack.c.h.b16 %v400
    %v577 = vunpack.c.l.b16 %v401
    %v578 = vunpack.c.h.b16 %v401
    %v579 = vunpack.c.l.b16 %v402
    %v580 = vunpack.c.h.b16 %v402
    %v581 = vunpack.c.l.b16 %v403
    %v582 = vunpack.c.h.b16 %v403
    %v583 = vunpack.c.l.b16 %v404
    %v584 = vunpack.c.h.b16 %v404
    %v585 = vunpack.c.l.b16 %v405
    %v586 = vunpack.c.h.b16 %v405
    %v587 = vunpack.c.l.b16 %v406
    %v588 = vunpack.c.h.b16 %v406
    %v589 = vunpack.c.l.b16 %v407
    %v590 = vunpack.c.h.b16 %v407
    %v591 = vunpack.c.l.b16 %v408
    %v592 = vunpack.c.h.b16 %v408
    %v593 = vunpack.c.l.b16 %v409
    %v594 = vunpack.c.h.b16 %v409
    %v595 = vunpack.c.l.b16 %v410
    %v596 = vunpack.c.h.b16 %v410
    %v597 = vunpack.c.l.b16 %v411
    %v598 = vunpack.c.h.b16 %v411
    %v599 = vunpack.c.l.b16 %v412
    %v600 = vunpack.c.h.b16 %v412
    %v601 = vunpack.c.l.b16 %v413
    %v602 = vunpack.c.h.b16 %v413
    %v603 = vunpack.c.l.b16 %v414
    %v604 = vunpack.c.h.b16 %v414
    %v605 = vunpack.c.l.b16 %v415
    %v606 = vunpack.c.h.b16 %v415
    %v607 = vunpack.c.l.b16 %v416
    %v608 = vunpack.c.h.b16 %v416
    %v609 = vunpack.c.l.b16 %v417
    %v610 = vunpack.c.h.b16 %v417
    %v611 = vunpack.c.l.b16 %v418
    %v612 = vunpack.c.h.b16 %v418
    %v613 = vunpack.c.l.b16 %v419
    %v614 = vunpack.c.h.b16 %v419
    %v615 = vunpack.c.l.b16 %v420
    %v616 = vunpack.c.h.b16 %v420
    %v617 = vunpack.c.l.b16 %v421
    %v618 = vunpack.c.h.b16 %v421
    %v619 = vunpack.c.l.b16 %v422
    %v620 = vunpack.c.h.b16 %v422
    %v621 = vpack.c.b16 %v495, %v493
    %v622 = vpack.c.b16 %v496, %v494
    %v623 = vpack.c.b16 %v499, %v497
    %v624 = vpack.c.b16 %v500, %v498
    %v625 = vpack.c.b16 %v503, %v501
    %v626 = vpack.c.b16 %v504, %v502
    %v627 = vpack.c.b16 %v507, %v505
    %v628 = vpack.c.b16 %v508, %v506
    %v629 = vpack.c.b16 %v511, %v509
    %v630 = vpack.c.b16 %v512, %v510
    %v631 = vpack.c.b16 %v515, %v513
    %v632 = vpack.c.b16 %v516, %v514
    %v633 = vpack.c.b16 %v519, %v517
    %v634 = vpack.c.b16 %v520, %v518
    %v635 = vpack.c.b16 %v523, %v521
    %v636 = vpack.c.b16 %v524, %v522
    %v637 = vpack.c.b16 %v527, %v525
    %v638 = vpack.c.b16 %v528, %v526
    %v639 = vpack.c.b16 %v531, %v529
    %v640 = vpack.c.b16 %v532, %v530
    %v641 = vpack.c.b16 %v535, %v533
    %v642 = vpack.c.b16 %v536, %v534
    %v643 = vpack.c.b16 %v539, %v537
    %v644 = vpack.c.b16 %v540, %v538
    %v645 = vpack.c.b16 %v543, %v541
    %v646 = vpack.c.b16 %v544, %v542
    %v647 = vpack.c.b16 %v547, %v545
    %v648 = vpack.c.b16 %v548, %v546
    %v649 = vpack.c.b16 %v551, %v549
    %v650 = vpack.c.b16 %v552, %v550
    %v651 = vpack.c.b16 %v555, %v553
    %v652 = vpack.c.b16 %v556, %v554
    %v653 = vpack.c.b16 %v559, %v557
    %v654 = vpack.c.b16 %v560, %v558
    %v655 = vpack.c.b16 %v563, %v561
    %v656 = vpack.c.b16 %v564, %v562
    %v657 = vpack.c.b16 %v567, %v565
    %v658 = vpack.c.b16 %v568, %v566
    %v659 = vpack.c.b16 %v571, %v569
    %v660 = vpack.c.b16 %v572, %v570
    %v661 = vpack.c.b16 %v575, %v573
    %v662 = vpack.c.b16 %v576, %v574
    %v663 = vpack.c.b16 %v579, %v577
    %v664 = vpack.c.b16 %v580, %v578
    %v665 = vpack.c.b16 %v583, %v581
    %v666 = vpack.c.b16 %v584, %v582
    %v667 = vpack.c.b16 %v587, %v585
    %v668 = vpack.c.b16 %v588, %v586
    %v669 = vpack.c.b16 %v591, %v589
    %v670 = vpack.c.b16 %v592, %v590
    %v671 = vpack.c.b16 %v595, %v593
    %v672 = vpack.c.b16 %v596, %v594
    %v673 = vpack.c.b16 %v599, %v597
    %v674 = vpack.c.b16 %v600, %v598
    %v675 = vpack.c.b16 %v603, %v601
    %v676 = vpack.c.b16 %v604, %v602
    %v677 = vpack.c.b16 %v607, %v605
    %v678 = vpack.c.b16 %v608, %v606
    %v679 = vpack.c.b16 %v611, %v609
    %v680 = vpack.c.b16 %v612, %v610
    %v681 = vpack.c.b16 %v615, %v613
    %v682 = vpack.c.b16 %v616, %v614
    %v683 = vpack.c.b16 %v619, %v617
    %v684 = vpack.c.b16 %v620, %v618
    %749 = vmatpush.bf16.msra.mxu0 %v635
    %750 = vmatpush.bf16.msra.mxu0 %v633
    %751 = vmatpush.bf16.msra.mxu0 %v631
    %752 = vmatpush.bf16.msra.mxu0 %v629
    %753 = vmatpush.bf16.msra.mxu0 %v627
    %754 = vmatpush.bf16.msra.mxu0 %v625
    %755 = vmatpush.bf16.msra.mxu0 %v623
    %756 = vmatpush.bf16.msra.mxu0 %v621
    %757 = vmatmul.bf16.gmra.mxu0 %v343
    %v758 = vpop.f32.mrf.mxu0
    %v759 = vadd.f32 %v425, %v758
    %v760 = vpop.f32.mrf.mxu0
    %v761 = vadd.f32 %v425, %v760
    %762 = vmatmul.bf16.gmra.mxu0 %v347
    %v763 = vpop.f32.mrf.mxu0
    %v764 = vadd.f32 %v425, %v763
    %v765 = vpop.f32.mrf.mxu0
    %v766 = vadd.f32 %v425, %v765
    %767 = vmatmul.bf16.gmra.mxu0 %v351
    %v768 = vpop.f32.mrf.mxu0
    %v769 = vadd.f32 %v425, %v768
    %v770 = vpop.f32.mrf.mxu0
    %v771 = vadd.f32 %v425, %v770
    %772 = vmatmul.bf16.gmra.mxu0 %v355
    %v773 = vpop.f32.mrf.mxu0
    %v774 = vadd.f32 %v425, %v773
    %v775 = vpop.f32.mrf.mxu0
    %v776 = vadd.f32 %v425, %v775
    %777 = vdwg.mxu0
    %778 = vmatpush.bf16.msra.mxu0 %v651
    %779 = vmatpush.bf16.msra.mxu0 %v649
    %780 = vmatpush.bf16.msra.mxu0 %v647
    %781 = vmatpush.bf16.msra.mxu0 %v645
    %782 = vmatpush.bf16.msra.mxu0 %v643
    %783 = vmatpush.bf16.msra.mxu0 %v641
    %784 = vmatpush.bf16.msra.mxu0 %v639
    %785 = vmatpush.bf16.msra.mxu0 %v637
    %786 = vmatmul.bf16.gmra.mxu0 %v344
    %v787 = vpop.f32.mrf.mxu0
    %v788 = vadd.f32 %v759, %v787
    %v789 = vpop.f32.mrf.mxu0
    %v790 = vadd.f32 %v761, %v789
    %791 = vmatmul.bf16.gmra.mxu0 %v348
    %v792 = vpop.f32.mrf.mxu0
    %v793 = vadd.f32 %v764, %v792
    %v794 = vpop.f32.mrf.mxu0
    %v795 = vadd.f32 %v766, %v794
    %796 = vmatmul.bf16.gmra.mxu0 %v352
    %v797 = vpop.f32.mrf.mxu0
    %v798 = vadd.f32 %v769, %v797
    %v799 = vpop.f32.mrf.mxu0
    %v800 = vadd.f32 %v771, %v799
    %801 = vmatmul.bf16.gmra.mxu0 %v356
    %v802 = vpop.f32.mrf.mxu0
    %v803 = vadd.f32 %v774, %v802
    %v804 = vpop.f32.mrf.mxu0
    %v805 = vadd.f32 %v776, %v804
    %806 = vdwg.mxu0
    %807 = vmatpush.bf16.msra.mxu0 %v667
    %808 = vmatpush.bf16.msra.mxu0 %v665
    %809 = vmatpush.bf16.msra.mxu0 %v663
    %810 = vmatpush.bf16.msra.mxu0 %v661
    %811 = vmatpush.bf16.msra.mxu0 %v659
    %812 = vmatpush.bf16.msra.mxu0 %v657
    %813 = vmatpush.bf16.msra.mxu0 %v655
    %814 = vmatpush.bf16.msra.mxu0 %v653
    %815 = vmatmul.bf16.gmra.mxu0 %v345
    %v816 = vpop.f32.mrf.mxu0
    %v817 = vadd.f32 %v788, %v816
    %v818 = vpop.f32.mrf.mxu0
    %v819 = vadd.f32 %v790, %v818
    %820 = vmatmul.bf16.gmra.mxu0 %v349
    %v821 = vpop.f32.mrf.mxu0
    %v822 = vadd.f32 %v793, %v821
    %v823 = vpop.f32.mrf.mxu0
    %v824 = vadd.f32 %v795, %v823
    %825 = vmatmul.bf16.gmra.mxu0 %v353
    %v826 = vpop.f32.mrf.mxu0
    %v827 = vadd.f32 %v798, %v826
    %v828 = vpop.f32.mrf.mxu0
    %v829 = vadd.f32 %v800, %v828
    %830 = vmatmul.bf16.gmra.mxu0 %v357
    %v831 = vpop.f32.mrf.mxu0
    %v832 = vadd.f32 %v803, %v831
    %v833 = vpop.f32.mrf.mxu0
    %v834 = vadd.f32 %v805, %v833
    %835 = vdwg.mxu0
    %836 = vmatpush.bf16.msra.mxu0 %v683
    %837 = vmatpush.bf16.msra.mxu0 %v681
    %838 = vmatpush.bf16.msra.mxu0 %v679
    %839 = vmatpush.bf16.msra.mxu0 %v677
    %840 = vmatpush.bf16.msra.mxu0 %v675
    %841 = vmatpush.bf16.msra.mxu0 %v673
    %842 = vmatpush.bf16.msra.mxu0 %v671
    %843 = vmatpush.bf16.msra.mxu0 %v669
    %844 = vmatmul.bf16.gmra.mxu0 %v346
    %v845 = vpop.f32.mrf.mxu0
    %v846 = vadd.f32 %v817, %v845
    %v847 = vpop.f32.mrf.mxu0
    %v848 = vadd.f32 %v819, %v847
    %849 = vmatmul.bf16.gmra.mxu0 %v350
    %v850 = vpop.f32.mrf.mxu0
    %v851 = vadd.f32 %v822, %v850
    %v852 = vpop.f32.mrf.mxu0
    %v853 = vadd.f32 %v824, %v852
    %854 = vmatmul.bf16.gmra.mxu0 %v354
    %v855 = vpop.f32.mrf.mxu0
    %v856 = vadd.f32 %v827, %v855
    %v857 = vpop.f32.mrf.mxu0
    %v858 = vadd.f32 %v829, %v857
    %859 = vmatmul.bf16.gmra.mxu0 %v358
    %v860 = vpop.f32.mrf.mxu0
    %v861 = vadd.f32 %v832, %v860
    %v862 = vpop.f32.mrf.mxu0
    %v863 = vadd.f32 %v834, %v862
    %864 = vdwg.mxu0
    %865 = vmatpush.bf16.msra.mxu0 %v636
    %866 = vmatpush.bf16.msra.mxu0 %v634
    %867 = vmatpush.bf16.msra.mxu0 %v632
    %868 = vmatpush.bf16.msra.mxu0 %v630
    %869 = vmatpush.bf16.msra.mxu0 %v628
    %870 = vmatpush.bf16.msra.mxu0 %v626
    %871 = vmatpush.bf16.msra.mxu0 %v624
    %872 = vmatpush.bf16.msra.mxu0 %v622
    %873 = vmatmul.bf16.gmra.mxu0 %v343
    %v874 = vpop.f32.mrf.mxu0
    %v875 = vadd.f32 %v426, %v874
    %v876 = vpop.f32.mrf.mxu0
    %v877 = vadd.f32 %v426, %v876
    %878 = vmatmul.bf16.gmra.mxu0 %v347
    %v879 = vpop.f32.mrf.mxu0
    %v880 = vadd.f32 %v426, %v879
    %v881 = vpop.f32.mrf.mxu0
    %v882 = vadd.f32 %v426, %v881
    %883 = vmatmul.bf16.gmra.mxu0 %v351
    %v884 = vpop.f32.mrf.mxu0
    %v885 = vadd.f32 %v426, %v884
    %v886 = vpop.f32.mrf.mxu0
    %v887 = vadd.f32 %v426, %v886
    %888 = vmatmul.bf16.gmra.mxu0 %v355
    %v889 = vpop.f32.mrf.mxu0
    %v890 = vadd.f32 %v426, %v889
    %v891 = vpop.f32.mrf.mxu0
    %v892 = vadd.f32 %v426, %v891
    %893 = vdwg.mxu0
    %894 = vmatpush.bf16.msra.mxu0 %v652
    %895 = vmatpush.bf16.msra.mxu0 %v650
    %896 = vmatpush.bf16.msra.mxu0 %v648
    %897 = vmatpush.bf16.msra.mxu0 %v646
    %898 = vmatpush.bf16.msra.mxu0 %v644
    %899 = vmatpush.bf16.msra.mxu0 %v642
    %900 = vmatpush.bf16.msra.mxu0 %v640
    %901 = vmatpush.bf16.msra.mxu0 %v638
    %902 = vmatmul.bf16.gmra.mxu0 %v344
    %v903 = vpop.f32.mrf.mxu0
    %v904 = vadd.f32 %v875, %v903
    %v905 = vpop.f32.mrf.mxu0
    %v906 = vadd.f32 %v877, %v905
    %907 = vmatmul.bf16.gmra.mxu0 %v348
    %v908 = vpop.f32.mrf.mxu0
    %v909 = vadd.f32 %v880, %v908
    %v910 = vpop.f32.mrf.mxu0
    %v911 = vadd.f32 %v882, %v910
    %912 = vmatmul.bf16.gmra.mxu0 %v352
    %v913 = vpop.f32.mrf.mxu0
    %v914 = vadd.f32 %v885, %v913
    %v915 = vpop.f32.mrf.mxu0
    %v916 = vadd.f32 %v887, %v915
    %917 = vmatmul.bf16.gmra.mxu0 %v356
    %v918 = vpop.f32.mrf.mxu0
    %v919 = vadd.f32 %v890, %v918
    %v920 = vpop.f32.mrf.mxu0
    %v921 = vadd.f32 %v892, %v920
    %922 = vdwg.mxu0
    %923 = vmatpush.bf16.msra.mxu0 %v668
    %924 = vmatpush.bf16.msra.mxu0 %v666
    %925 = vmatpush.bf16.msra.mxu0 %v664
    %926 = vmatpush.bf16.msra.mxu0 %v662
    %927 = vmatpush.bf16.msra.mxu0 %v660
    %928 = vmatpush.bf16.msra.mxu0 %v658
    %929 = vmatpush.bf16.msra.mxu0 %v656
    %930 = vmatpush.bf16.msra.mxu0 %v654
    %931 = vmatmul.bf16.gmra.mxu0 %v345
    %v932 = vpop.f32.mrf.mxu0
    %v933 = vadd.f32 %v904, %v932
    %v934 = vpop.f32.mrf.mxu0
    %v935 = vadd.f32 %v906, %v934
    %936 = vmatmul.bf16.gmra.mxu0 %v349
    %v937 = vpop.f32.mrf.mxu0
    %v938 = vadd.f32 %v909, %v937
    %v939 = vpop.f32.mrf.mxu0
    %v940 = vadd.f32 %v911, %v939
    %941 = vmatmul.bf16.gmra.mxu0 %v353
    %v942 = vpop.f32.mrf.mxu0
    %v943 = vadd.f32 %v914, %v942
    %v944 = vpop.f32.mrf.mxu0
    %v945 = vadd.f32 %v916, %v944
    %946 = vmatmul.bf16.gmra.mxu0 %v357
    %v947 = vpop.f32.mrf.mxu0
    %v948 = vadd.f32 %v919, %v947
    %v949 = vpop.f32.mrf.mxu0
    %v950 = vadd.f32 %v921, %v949
    %951 = vdwg.mxu0
    %952 = vmatpush.bf16.msra.mxu0 %v684
    %953 = vmatpush.bf16.msra.mxu0 %v682
    %954 = vmatpush.bf16.msra.mxu0 %v680
    %955 = vmatpush.bf16.msra.mxu0 %v678
    %956 = vmatpush.bf16.msra.mxu0 %v676
    %957 = vmatpush.bf16.msra.mxu0 %v674
    %958 = vmatpush.bf16.msra.mxu0 %v672
    %959 = vmatpush.bf16.msra.mxu0 %v670
    %960 = vmatmul.bf16.gmra.mxu0 %v346
    %v961 = vpop.f32.mrf.mxu0
    %v962 = vadd.f32 %v933, %v961
    %v963 = vpop.f32.mrf.mxu0
    %v964 = vadd.f32 %v935, %v963
    %965 = vmatmul.bf16.gmra.mxu0 %v350
    %v966 = vpop.f32.mrf.mxu0
    %v967 = vadd.f32 %v938, %v966
    %v968 = vpop.f32.mrf.mxu0
    %v969 = vadd.f32 %v940, %v968
    %970 = vmatmul.bf16.gmra.mxu0 %v354
    %v971 = vpop.f32.mrf.mxu0
    %v972 = vadd.f32 %v943, %v971
    %v973 = vpop.f32.mrf.mxu0
    %v974 = vadd.f32 %v945, %v973
    %975 = vmatmul.bf16.gmra.mxu0 %v358
    %v976 = vpop.f32.mrf.mxu0
    %v977 = vadd.f32 %v948, %v976
    %v978 = vpop.f32.mrf.mxu0
    %v979 = vadd.f32 %v950, %v978
    %980 = vdwg.mxu0
    %v981 = vmax.f32 %v846, 0.0
    %v982 = vmax.f32 %v962, 0.0
    %v983 = vmax.f32 %v848, 0.0
    %v984 = vmax.f32 %v964, 0.0
    %v985 = vmax.f32 %v851, 0.0
    %v986 = vmax.f32 %v967, 0.0
    %v987 = vmax.f32 %v853, 0.0
    %v988 = vmax.f32 %v969, 0.0
    %v989 = vmax.f32 %v856, 0.0
    %v990 = vmax.f32 %v972, 0.0
    %v991 = vmax.f32 %v858, 0.0
    %v992 = vmax.f32 %v974, 0.0
    %v993 = vmax.f32 %v861, 0.0
    %v994 = vmax.f32 %v977, 0.0
    %v995 = vmax.f32 %v863, 0.0
    %v996 = vmax.f32 %v979, 0.0
    %v997 = vpack.c.bf16 %v983, %v981
    %v998 = vpack.c.bf16 %v984, %v982
    %v999 = vpack.c.bf16 %v987, %v985
    %v1000 = vpack.c.bf16 %v988, %v986
    %v1001 = vpack.c.bf16 %v991, %v989
    %v1002 = vpack.c.bf16 %v992, %v990
    %v1003 = vpack.c.bf16 %v995, %v993
    %v1004 = vpack.c.bf16 %v996, %v994
    %v1005 = vld [vmem:[#allocation6] sm:$0xf]
    %v1006 = vld [vmem:[#allocation6 + $0x4] sm:$0xf]
    %v1007 = vld [vmem:[#allocation6 + $0x8] sm:$0xf]
    %v1008 = vld [vmem:[#allocation6 + $0xc] sm:$0xf]
    %v1009 = vld [vmem:[#allocation6 + $0x10] sm:$0xf]
    %v1010 = vld [vmem:[#allocation6 + $0x14] sm:$0xf]
    %v1011 = vld [vmem:[#allocation6 + $0x18] sm:$0xf]
    %v1012 = vld [vmem:[#allocation6 + $0x1c] sm:$0xf]
    %v1013 = vld [vmem:[#allocation6 + $0x20] sm:$0xf]
    %v1014 = vld [vmem:[#allocation6 + $0x24] sm:$0xf]
    %v1015 = vld [vmem:[#allocation6 + $0x28] sm:$0xf]
    %v1016 = vld [vmem:[#allocation6 + $0x2c] sm:$0xf]
    %v1017 = vld [vmem:[#allocation6 + $0x30] sm:$0xf]
    %v1018 = vld [vmem:[#allocation6 + $0x34] sm:$0xf]
    %v1019 = vld [vmem:[#allocation6 + $0x38] sm:$0xf]
    %v1020 = vld [vmem:[#allocation6 + $0x3c] sm:$0xf]
    %v1021 = vld [vmem:[#allocation6 + $0x40] sm:$0xf]
    %v1022 = vld [vmem:[#allocation6 + $0x44] sm:$0xf]
    %v1023 = vld [vmem:[#allocation6 + $0x48] sm:$0xf]
    %v1024 = vld [vmem:[#allocation6 + $0x4c] sm:$0xf]
    %v1025 = vld [vmem:[#allocation6 + $0x50] sm:$0xf]
    %v1026 = vld [vmem:[#allocation6 + $0x54] sm:$0xf]
    %v1027 = vld [vmem:[#allocation6 + $0x58] sm:$0xf]
    %v1028 = vld [vmem:[#allocation6 + $0x5c] sm:$0xf]
    %v1029 = vld [vmem:[#allocation6 + $0x60] sm:$0xf]
    %v1030 = vld [vmem:[#allocation6 + $0x64] sm:$0xf]
    %v1031 = vld [vmem:[#allocation6 + $0x68] sm:$0xf]
    %v1032 = vld [vmem:[#allocation6 + $0x6c] sm:$0xf]
    %v1033 = vld [vmem:[#allocation6 + $0x70] sm:$0xf]
    %v1034 = vld [vmem:[#allocation6 + $0x74] sm:$0xf]
    %v1035 = vld [vmem:[#allocation6 + $0x78] sm:$0xf]
    %v1036 = vld [vmem:[#allocation6 + $0x7c] sm:$0xf]
    %v1037 = vld [vmem:[%s6] sm:$0x1]
    %v1039 = vperm.slane %v1037, 0
    %v1073 = vunpack.c.l.b16 %v1005
    %v1074 = vunpack.c.l.b16 %v1006
    %v1075 = vunpack.c.l.b16 %v1007
    %v1076 = vunpack.c.l.b16 %v1008
    %v1077 = vunpack.c.l.b16 %v1009
    %v1078 = vunpack.c.l.b16 %v1010
    %v1079 = vunpack.c.l.b16 %v1011
    %v1080 = vunpack.c.l.b16 %v1012
    %v1081 = vunpack.c.l.b16 %v1013
    %v1082 = vunpack.c.l.b16 %v1014
    %v1083 = vunpack.c.l.b16 %v1015
    %v1084 = vunpack.c.l.b16 %v1016
    %v1085 = vunpack.c.l.b16 %v1017
    %v1086 = vunpack.c.l.b16 %v1018
    %v1087 = vunpack.c.l.b16 %v1019
    %v1088 = vunpack.c.l.b16 %v1020
    %v1089 = vunpack.c.l.b16 %v1021
    %v1090 = vunpack.c.l.b16 %v1022
    %v1091 = vunpack.c.l.b16 %v1023
    %v1092 = vunpack.c.l.b16 %v1024
    %v1093 = vunpack.c.l.b16 %v1025
    %v1094 = vunpack.c.l.b16 %v1026
    %v1095 = vunpack.c.l.b16 %v1027
    %v1096 = vunpack.c.l.b16 %v1028
    %v1097 = vunpack.c.l.b16 %v1029
    %v1098 = vunpack.c.l.b16 %v1030
    %v1099 = vunpack.c.l.b16 %v1031
    %v1100 = vunpack.c.l.b16 %v1032
    %v1101 = vunpack.c.l.b16 %v1033
    %v1102 = vunpack.c.l.b16 %v1034
    %v1103 = vunpack.c.l.b16 %v1035
    %v1104 = vunpack.c.l.b16 %v1036
    %v1105 = vpack.c.b16 %v1074, %v1073
    %v1106 = vpack.c.b16 %v1076, %v1075
    %v1107 = vpack.c.b16 %v1078, %v1077
    %v1108 = vpack.c.b16 %v1080, %v1079
    %v1109 = vpack.c.b16 %v1082, %v1081
    %v1110 = vpack.c.b16 %v1084, %v1083
    %v1111 = vpack.c.b16 %v1086, %v1085
    %v1112 = vpack.c.b16 %v1088, %v1087
    %v1113 = vpack.c.b16 %v1090, %v1089
    %v1114 = vpack.c.b16 %v1092, %v1091
    %v1115 = vpack.c.b16 %v1094, %v1093
    %v1116 = vpack.c.b16 %v1096, %v1095
    %v1117 = vpack.c.b16 %v1098, %v1097
    %v1118 = vpack.c.b16 %v1100, %v1099
    %v1119 = vpack.c.b16 %v1102, %v1101
    %v1120 = vpack.c.b16 %v1104, %v1103
    %1137 = vmatpush.bf16.msra.mxu0 %v1112
    %1138 = vmatpush.bf16.msra.mxu0 %v1111
    %1139 = vmatpush.bf16.msra.mxu0 %v1110
    %1140 = vmatpush.bf16.msra.mxu0 %v1109
    %1141 = vmatpush.bf16.msra.mxu0 %v1108
    %1142 = vmatpush.bf16.msra.mxu0 %v1107
    %1143 = vmatpush.bf16.msra.mxu0 %v1106
    %1144 = vmatpush.bf16.msra.mxu0 %v1105
    %1145 = vmatmul.bf16.gmra.mxu0 %v997
    %v1146 = vpop.f32.mrf.mxu0
    %v1147 = vadd.f32 %v1039, %v1146
    %v1148 = vpop.f32.mrf.mxu0
    %v1149 = vadd.f32 %v1039, %v1148
    %1150 = vmatmul.bf16.gmra.mxu0 %v999
    %v1151 = vpop.f32.mrf.mxu0
    %v1152 = vadd.f32 %v1039, %v1151
    %v1153 = vpop.f32.mrf.mxu0
    %v1154 = vadd.f32 %v1039, %v1153
    %1155 = vmatmul.bf16.gmra.mxu0 %v1001
    %v1156 = vpop.f32.mrf.mxu0
    %v1157 = vadd.f32 %v1039, %v1156
    %v1158 = vpop.f32.mrf.mxu0
    %v1159 = vadd.f32 %v1039, %v1158
    %1160 = vmatmul.bf16.gmra.mxu0 %v1003
    %v1161 = vpop.f32.mrf.mxu0
    %v1162 = vadd.f32 %v1039, %v1161
    %v1163 = vpop.f32.mrf.mxu0
    %v1164 = vadd.f32 %v1039, %v1163
    %1165 = vdwg.mxu0
    %1166 = vmatpush.bf16.msra.mxu0 %v1120
    %1167 = vmatpush.bf16.msra.mxu0 %v1119
    %1168 = vmatpush.bf16.msra.mxu0 %v1118
    %1169 = vmatpush.bf16.msra.mxu0 %v1117
    %1170 = vmatpush.bf16.msra.mxu0 %v1116
    %1171 = vmatpush.bf16.msra.mxu0 %v1115
    %1172 = vmatpush.bf16.msra.mxu0 %v1114
    %1173 = vmatpush.bf16.msra.mxu0 %v1113
    %1174 = vmatmul.bf16.gmra.mxu0 %v998
    %v1175 = vpop.f32.mrf.mxu0
    %v1176 = vadd.f32 %v1147, %v1175
    %v1177 = vpop.f32.mrf.mxu0
    %v1178 = vadd.f32 %v1149, %v1177
    %1179 = vmatmul.bf16.gmra.mxu0 %v1000
    %v1180 = vpop.f32.mrf.mxu0
    %v1181 = vadd.f32 %v1152, %v1180
    %v1182 = vpop.f32.mrf.mxu0
    %v1183 = vadd.f32 %v1154, %v1182
    %1184 = vmatmul.bf16.gmra.mxu0 %v1002
    %v1185 = vpop.f32.mrf.mxu0
    %v1186 = vadd.f32 %v1157, %v1185
    %v1187 = vpop.f32.mrf.mxu0
    %v1188 = vadd.f32 %v1159, %v1187
    %1189 = vmatmul.bf16.gmra.mxu0 %v1004
    %v1190 = vpop.f32.mrf.mxu0
    %v1191 = vadd.f32 %v1162, %v1190
    %v1192 = vpop.f32.mrf.mxu0
    %v1193 = vadd.f32 %v1164, %v1192
    %1194 = vdwg.mxu0
    %v1195 = vmax.f32 %v1176, 0.0
    %v1196 = vmax.f32 %v1178, 0.0
    %v1197 = vmax.f32 %v1181, 0.0
    %v1198 = vmax.f32 %v1183, 0.0
    %v1199 = vmax.f32 %v1186, 0.0
    %v1200 = vmax.f32 %v1188, 0.0
    %v1201 = vmax.f32 %v1191, 0.0
    %v1202 = vmax.f32 %v1193, 0.0
    %v1203 = vpack.c.bf16 %v1196, %v1195
    %v1204 = vpack.c.bf16 %v1198, %v1197
    %v1205 = vpack.c.bf16 %v1200, %v1199
    %v1206 = vpack.c.bf16 %v1202, %v1201
    %v1207 = vld [vmem:[#allocation7] sm:$0xff]
    %v1208 = vld [vmem:[#allocation7 + $0x8] sm:$0xff]
    %v1209 = vld [vmem:[#allocation7 + $0x10] sm:$0xff]
    %v1210 = vld [vmem:[#allocation7 + $0x18] sm:$0xf]
    %v1211 = vld [vmem:[#allocation7 + $0x1c] sm:$0xff]
    %v1212 = vld [vmem:[#allocation7 + $0x24] sm:$0xff]
    %v1213 = vld [vmem:[#allocation7 + $0x2c] sm:$0xff]
    %v1214 = vld [vmem:[#allocation7 + $0x34] sm:$0xf]
    %v1215 = vld [vmem:[#allocation7 + $0x38] sm:$0xff]
    %v1216 = vld [vmem:[#allocation7 + $0x40] sm:$0xff]
    %v1217 = vld [vmem:[#allocation7 + $0x48] sm:$0xff]
    %v1218 = vld [vmem:[#allocation7 + $0x50] sm:$0xf]
    %v1219 = vld [vmem:[#allocation7 + $0x54] sm:$0xff]
    %v1220 = vld [vmem:[#allocation7 + $0x5c] sm:$0xff]
    %v1221 = vld [vmem:[#allocation7 + $0x64] sm:$0xff]
    %v1222 = vld [vmem:[#allocation7 + $0x6c] sm:$0xf]
    %v1223 = vld [vmem:[#allocation7 + $0x70] sm:$0xff]
    %v1224 = vld [vmem:[#allocation7 + $0x78] sm:$0xff]
    %v1225 = vld [vmem:[#allocation7 + $0x80] sm:$0xff]
    %v1226 = vld [vmem:[#allocation7 + $0x88] sm:$0xf]
    %v1227 = vld [vmem:[#allocation7 + $0x8c] sm:$0xff]
    %v1228 = vld [vmem:[#allocation7 + $0x94] sm:$0xff]
    %v1229 = vld [vmem:[#allocation7 + $0x9c] sm:$0xff]
    %v1230 = vld [vmem:[#allocation7 + $0xa4] sm:$0xf]
    %v1231 = vld [vmem:[#allocation7 + $0xa8] sm:$0xff]
    %v1232 = vld [vmem:[#allocation7 + $0xb0] sm:$0xff]
    %v1233 = vld [vmem:[#allocation7 + $0xb8] sm:$0xff]
    %v1234 = vld [vmem:[#allocation7 + $0xc0] sm:$0xf]
    %v1235 = vld [vmem:[#allocation7 + $0xc4] sm:$0xff]
    %v1236 = vld [vmem:[#allocation7 + $0xcc] sm:$0xff]
    %v1237 = vld [vmem:[#allocation7 + $0xd4] sm:$0xff]
    %v1238 = vld [vmem:[#allocation7 + $0xdc] sm:$0xf]
    %v1239 = vld [vmem:[#allocation7 + $0xe0] sm:$0xff]
    %v1240 = vld [vmem:[#allocation7 + $0xe8] sm:$0xff]
    %v1241 = vld [vmem:[#allocation7 + $0xf0] sm:$0xff]
    %v1242 = vld [vmem:[#allocation7 + $0xf8] sm:$0xf]
    %v1243 = vld [vmem:[#allocation7 + $0xfc] sm:$0xff]
    %v1244 = vld [vmem:[#allocation7 + $0x104] sm:$0xff]
    %v1245 = vld [vmem:[#allocation7 + $0x10c] sm:$0xff]
    %v1246 = vld [vmem:[#allocation7 + $0x114] sm:$0xf]
    %v1247 = vld [vmem:[#allocation7 + $0x118] sm:$0xff]
    %v1248 = vld [vmem:[#allocation7 + $0x120] sm:$0xff]
    %v1249 = vld [vmem:[#allocation7 + $0x128] sm:$0xff]
    %v1250 = vld [vmem:[#allocation7 + $0x130] sm:$0xf]
    %v1251 = vld [vmem:[#allocation7 + $0x134] sm:$0xff]
    %v1252 = vld [vmem:[#allocation7 + $0x13c] sm:$0xff]
    %v1253 = vld [vmem:[#allocation7 + $0x144] sm:$0xff]
    %v1254 = vld [vmem:[#allocation7 + $0x14c] sm:$0xf]
    %v1255 = vld [vmem:[#allocation7 + $0x150] sm:$0xff]
    %v1256 = vld [vmem:[#allocation7 + $0x158] sm:$0xff]
    %v1257 = vld [vmem:[#allocation7 + $0x160] sm:$0xff]
    %v1258 = vld [vmem:[#allocation7 + $0x168] sm:$0xf]
    %v1259 = vld [vmem:[#allocation7 + $0x16c] sm:$0xff]
    %v1260 = vld [vmem:[#allocation7 + $0x174] sm:$0xff]
    %v1261 = vld [vmem:[#allocation7 + $0x17c] sm:$0xff]
    %v1262 = vld [vmem:[#allocation7 + $0x184] sm:$0xf]
    %v1263 = vld [vmem:[#allocation7 + $0x188] sm:$0xff]
    %v1264 = vld [vmem:[#allocation7 + $0x190] sm:$0xff]
    %v1265 = vld [vmem:[#allocation7 + $0x198] sm:$0xff]
    %v1266 = vld [vmem:[#allocation7 + $0x1a0] sm:$0xf]
    %v1267 = vld [vmem:[#allocation7 + $0x1a4] sm:$0xff]
    %v1268 = vld [vmem:[#allocation7 + $0x1ac] sm:$0xff]
    %v1269 = vld [vmem:[#allocation7 + $0x1b4] sm:$0xff]
    %v1270 = vld [vmem:[#allocation7 + $0x1bc] sm:$0xf]
    %v1271 = vld [vmem:[%s8] sm:$0xff]
    %v1273 = vperm.slane %v1271, 0
    %v1274 = vperm.slane %v1271, 1
    %v1275 = vperm.slane %v1271, 2
    %v1276 = vperm.slane %v1271, 3
    %v1277 = vperm.slane %v1271, 4
    %v1278 = vperm.slane %v1271, 5
    %v1279 = vperm.slane %v1271, 6
    %v1351 = vunpack.c.l.b16 %v1207
    %v1352 = vunpack.c.h.b16 %v1207
    %v1353 = vunpack.c.l.b16 %v1208
    %v1354 = vunpack.c.h.b16 %v1208
    %v1355 = vunpack.c.l.b16 %v1209
    %v1356 = vunpack.c.h.b16 %v1209
    %v1357 = vunpack.c.l.b16 %v1210
    %v1358 = vunpack.c.l.b16 %v1211
    %v1359 = vunpack.c.h.b16 %v1211
    %v1360 = vunpack.c.l.b16 %v1212
    %v1361 = vunpack.c.h.b16 %v1212
    %v1362 = vunpack.c.l.b16 %v1213
    %v1363 = vunpack.c.h.b16 %v1213
    %v1364 = vunpack.c.l.b16 %v1214
    %v1365 = vunpack.c.l.b16 %v1215
    %v1366 = vunpack.c.h.b16 %v1215
    %v1367 = vunpack.c.l.b16 %v1216
    %v1368 = vunpack.c.h.b16 %v1216
    %v1369 = vunpack.c.l.b16 %v1217
    %v1370 = vunpack.c.h.b16 %v1217
    %v1371 = vunpack.c.l.b16 %v1218
    %v1372 = vunpack.c.l.b16 %v1219
    %v1373 = vunpack.c.h.b16 %v1219
    %v1374 = vunpack.c.l.b16 %v1220
    %v1375 = vunpack.c.h.b16 %v1220
    %v1376 = vunpack.c.l.b16 %v1221
    %v1377 = vunpack.c.h.b16 %v1221
    %v1378 = vunpack.c.l.b16 %v1222
    %v1379 = vunpack.c.l.b16 %v1223
    %v1380 = vunpack.c.h.b16 %v1223
    %v1381 = vunpack.c.l.b16 %v1224
    %v1382 = vunpack.c.h.b16 %v1224
    %v1383 = vunpack.c.l.b16 %v1225
    %v1384 = vunpack.c.h.b16 %v1225
    %v1385 = vunpack.c.l.b16 %v1226
    %v1386 = vunpack.c.l.b16 %v1227
    %v1387 = vunpack.c.h.b16 %v1227
    %v1388 = vunpack.c.l.b16 %v1228
    %v1389 = vunpack.c.h.b16 %v1228
    %v1390 = vunpack.c.l.b16 %v1229
    %v1391 = vunpack.c.h.b16 %v1229
    %v1392 = vunpack.c.l.b16 %v1230
    %v1393 = vunpack.c.l.b16 %v1231
    %v1394 = vunpack.c.h.b16 %v1231
    %v1395 = vunpack.c.l.b16 %v1232
    %v1396 = vunpack.c.h.b16 %v1232
    %v1397 = vunpack.c.l.b16 %v1233
    %v1398 = vunpack.c.h.b16 %v1233
    %v1399 = vunpack.c.l.b16 %v1234
    %v1400 = vunpack.c.l.b16 %v1235
    %v1401 = vunpack.c.h.b16 %v1235
    %v1402 = vunpack.c.l.b16 %v1236
    %v1403 = vunpack.c.h.b16 %v1236
    %v1404 = vunpack.c.l.b16 %v1237
    %v1405 = vunpack.c.h.b16 %v1237
    %v1406 = vunpack.c.l.b16 %v1238
    %v1407 = vunpack.c.l.b16 %v1239
    %v1408 = vunpack.c.h.b16 %v1239
    %v1409 = vunpack.c.l.b16 %v1240
    %v1410 = vunpack.c.h.b16 %v1240
    %v1411 = vunpack.c.l.b16 %v1241
    %v1412 = vunpack.c.h.b16 %v1241
    %v1413 = vunpack.c.l.b16 %v1242
    %v1414 = vunpack.c.l.b16 %v1243
    %v1415 = vunpack.c.h.b16 %v1243
    %v1416 = vunpack.c.l.b16 %v1244
    %v1417 = vunpack.c.h.b16 %v1244
    %v1418 = vunpack.c.l.b16 %v1245
    %v1419 = vunpack.c.h.b16 %v1245
    %v1420 = vunpack.c.l.b16 %v1246
    %v1421 = vunpack.c.l.b16 %v1247
    %v1422 = vunpack.c.h.b16 %v1247
    %v1423 = vunpack.c.l.b16 %v1248
    %v1424 = vunpack.c.h.b16 %v1248
    %v1425 = vunpack.c.l.b16 %v1249
    %v1426 = vunpack.c.h.b16 %v1249
    %v1427 = vunpack.c.l.b16 %v1250
    %v1428 = vunpack.c.l.b16 %v1251
    %v1429 = vunpack.c.h.b16 %v1251
    %v1430 = vunpack.c.l.b16 %v1252
    %v1431 = vunpack.c.h.b16 %v1252
    %v1432 = vunpack.c.l.b16 %v1253
    %v1433 = vunpack.c.h.b16 %v1253
    %v1434 = vunpack.c.l.b16 %v1254
    %v1435 = vunpack.c.l.b16 %v1255
    %v1436 = vunpack.c.h.b16 %v1255
    %v1437 = vunpack.c.l.b16 %v1256
    %v1438 = vunpack.c.h.b16 %v1256
    %v1439 = vunpack.c.l.b16 %v1257
    %v1440 = vunpack.c.h.b16 %v1257
    %v1441 = vunpack.c.l.b16 %v1258
    %v1442 = vunpack.c.l.b16 %v1259
    %v1443 = vunpack.c.h.b16 %v1259
    %v1444 = vunpack.c.l.b16 %v1260
    %v1445 = vunpack.c.h.b16 %v1260
    %v1446 = vunpack.c.l.b16 %v1261
    %v1447 = vunpack.c.h.b16 %v1261
    %v1448 = vunpack.c.l.b16 %v1262
    %v1449 = vunpack.c.l.b16 %v1263
    %v1450 = vunpack.c.h.b16 %v1263
    %v1451 = vunpack.c.l.b16 %v1264
    %v1452 = vunpack.c.h.b16 %v1264
    %v1453 = vunpack.c.l.b16 %v1265
    %v1454 = vunpack.c.h.b16 %v1265
    %v1455 = vunpack.c.l.b16 %v1266
    %v1456 = vunpack.c.l.b16 %v1267
    %v1457 = vunpack.c.h.b16 %v1267
    %v1458 = vunpack.c.l.b16 %v1268
    %v1459 = vunpack.c.h.b16 %v1268
    %v1460 = vunpack.c.l.b16 %v1269
    %v1461 = vunpack.c.h.b16 %v1269
    %v1462 = vunpack.c.l.b16 %v1270
    %v1463 = vpack.c.b16 %v1358, %v1351
    %v1464 = vpack.c.b16 %v1359, %v1352
    %v1465 = vpack.c.b16 %v1360, %v1353
    %v1466 = vpack.c.b16 %v1361, %v1354
    %v1467 = vpack.c.b16 %v1362, %v1355
    %v1468 = vpack.c.b16 %v1363, %v1356
    %v1469 = vpack.c.b16 %v1364, %v1357
    %v1470 = vpack.c.b16 %v1372, %v1365
    %v1471 = vpack.c.b16 %v1373, %v1366
    %v1472 = vpack.c.b16 %v1374, %v1367
    %v1473 = vpack.c.b16 %v1375, %v1368
    %v1474 = vpack.c.b16 %v1376, %v1369
    %v1475 = vpack.c.b16 %v1377, %v1370
    %v1476 = vpack.c.b16 %v1378, %v1371
    %v1477 = vpack.c.b16 %v1386, %v1379
    %v1478 = vpack.c.b16 %v1387, %v1380
    %v1479 = vpack.c.b16 %v1388, %v1381
    %v1480 = vpack.c.b16 %v1389, %v1382
    %v1481 = vpack.c.b16 %v1390, %v1383
    %v1482 = vpack.c.b16 %v1391, %v1384
    %v1483 = vpack.c.b16 %v1392, %v1385
    %v1484 = vpack.c.b16 %v1400, %v1393
    %v1485 = vpack.c.b16 %v1401, %v1394
    %v1486 = vpack.c.b16 %v1402, %v1395
    %v1487 = vpack.c.b16 %v1403, %v1396
    %v1488 = vpack.c.b16 %v1404, %v1397
    %v1489 = vpack.c.b16 %v1405, %v1398
    %v1490 = vpack.c.b16 %v1406, %v1399
    %v1491 = vpack.c.b16 %v1414, %v1407
    %v1492 = vpack.c.b16 %v1415, %v1408
    %v1493 = vpack.c.b16 %v1416, %v1409
    %v1494 = vpack.c.b16 %v1417, %v1410
    %v1495 = vpack.c.b16 %v1418, %v1411
    %v1496 = vpack.c.b16 %v1419, %v1412
    %v1497 = vpack.c.b16 %v1420, %v1413
    %v1498 = vpack.c.b16 %v1428, %v1421
    %v1499 = vpack.c.b16 %v1429, %v1422
    %v1500 = vpack.c.b16 %v1430, %v1423
    %v1501 = vpack.c.b16 %v1431, %v1424
    %v1502 = vpack.c.b16 %v1432, %v1425
    %v1503 = vpack.c.b16 %v1433, %v1426
    %v1504 = vpack.c.b16 %v1434, %v1427
    %v1505 = vpack.c.b16 %v1442, %v1435
    %v1506 = vpack.c.b16 %v1443, %v1436
    %v1507 = vpack.c.b16 %v1444, %v1437
    %v1508 = vpack.c.b16 %v1445, %v1438
    %v1509 = vpack.c.b16 %v1446, %v1439
    %v1510 = vpack.c.b16 %v1447, %v1440
    %v1511 = vpack.c.b16 %v1448, %v1441
    %v1512 = vpack.c.b16 %v1456, %v1449
    %v1513 = vpack.c.b16 %v1457, %v1450
    %v1514 = vpack.c.b16 %v1458, %v1451
    %v1515 = vpack.c.b16 %v1459, %v1452
    %v1516 = vpack.c.b16 %v1460, %v1453
    %v1517 = vpack.c.b16 %v1461, %v1454
    %v1518 = vpack.c.b16 %v1462, %v1455
    %1575 = vmatpush.bf16.msra.mxu0 %v1512
    %1576 = vmatpush.bf16.msra.mxu0 %v1505
    %1577 = vmatpush.bf16.msra.mxu0 %v1498
    %1578 = vmatpush.bf16.msra.mxu0 %v1491
    %1579 = vmatpush.bf16.msra.mxu0 %v1484
    %1580 = vmatpush.bf16.msra.mxu0 %v1477
    %1581 = vmatpush.bf16.msra.mxu0 %v1470
    %1582 = vmatpush.bf16.msra.mxu0 %v1463
    %1583 = vmatmul.bf16.gmra.mxu0 %v1203
    %v1584 = vpop.f32.mrf.mxu0
    %v1585 = vadd.f32 %v1273, %v1584
    %v1586 = vpop.f32.mrf.mxu0
    %v1587 = vadd.f32 %v1273, %v1586
    %1588 = vmatmul.bf16.gmra.mxu0 %v1204
    %v1589 = vpop.f32.mrf.mxu0
    %v1590 = vadd.f32 %v1273, %v1589
    %v1591 = vpop.f32.mrf.mxu0
    %v1592 = vadd.f32 %v1273, %v1591
    %1593 = vmatmul.bf16.gmra.mxu0 %v1205
    %v1594 = vpop.f32.mrf.mxu0
    %v1595 = vadd.f32 %v1273, %v1594
    %v1596 = vpop.f32.mrf.mxu0
    %v1597 = vadd.f32 %v1273, %v1596
    %1598 = vmatmul.bf16.gmra.mxu0 %v1206
    %v1599 = vpop.f32.mrf.mxu0
    %v1600 = vadd.f32 %v1273, %v1599
    %v1601 = vpop.f32.mrf.mxu0
    %v1602 = vadd.f32 %v1273, %v1601
    %1603 = vdwg.mxu0
    %1604 = vmatpush.bf16.msra.mxu0 %v1513
    %1605 = vmatpush.bf16.msra.mxu0 %v1506
    %1606 = vmatpush.bf16.msra.mxu0 %v1499
    %1607 = vmatpush.bf16.msra.mxu0 %v1492
    %1608 = vmatpush.bf16.msra.mxu0 %v1485
    %1609 = vmatpush.bf16.msra.mxu0 %v1478
    %1610 = vmatpush.bf16.msra.mxu0 %v1471
    %1611 = vmatpush.bf16.msra.mxu0 %v1464
    %1612 = vmatmul.bf16.gmra.mxu0 %v1203
    %v1613 = vpop.f32.mrf.mxu0
    %v1614 = vadd.f32 %v1274, %v1613
    %v1615 = vpop.f32.mrf.mxu0
    %v1616 = vadd.f32 %v1274, %v1615
    %1617 = vmatmul.bf16.gmra.mxu0 %v1204
    %v1618 = vpop.f32.mrf.mxu0
    %v1619 = vadd.f32 %v1274, %v1618
    %v1620 = vpop.f32.mrf.mxu0
    %v1621 = vadd.f32 %v1274, %v1620
    %1622 = vmatmul.bf16.gmra.mxu0 %v1205
    %v1623 = vpop.f32.mrf.mxu0
    %v1624 = vadd.f32 %v1274, %v1623
    %v1625 = vpop.f32.mrf.mxu0
    %v1626 = vadd.f32 %v1274, %v1625
    %1627 = vmatmul.bf16.gmra.mxu0 %v1206
    %v1628 = vpop.f32.mrf.mxu0
    %v1629 = vadd.f32 %v1274, %v1628
    %v1630 = vpop.f32.mrf.mxu0
    %v1631 = vadd.f32 %v1274, %v1630
    %1632 = vdwg.mxu0
    %1633 = vmatpush.bf16.msra.mxu0 %v1514
    %1634 = vmatpush.bf16.msra.mxu0 %v1507
    %1635 = vmatpush.bf16.msra.mxu0 %v1500
    %1636 = vmatpush.bf16.msra.mxu0 %v1493
    %1637 = vmatpush.bf16.msra.mxu0 %v1486
    %1638 = vmatpush.bf16.msra.mxu0 %v1479
    %1639 = vmatpush.bf16.msra.mxu0 %v1472
    %1640 = vmatpush.bf16.msra.mxu0 %v1465
    %1641 = vmatmul.bf16.gmra.mxu0 %v1203
    %v1642 = vpop.f32.mrf.mxu0
    %v1643 = vadd.f32 %v1275, %v1642
    %v1644 = vpop.f32.mrf.mxu0
    %v1645 = vadd.f32 %v1275, %v1644
    %1646 = vmatmul.bf16.gmra.mxu0 %v1204
    %v1647 = vpop.f32.mrf.mxu0
    %v1648 = vadd.f32 %v1275, %v1647
    %v1649 = vpop.f32.mrf.mxu0
    %v1650 = vadd.f32 %v1275, %v1649
    %1651 = vmatmul.bf16.gmra.mxu0 %v1205
    %v1652 = vpop.f32.mrf.mxu0
    %v1653 = vadd.f32 %v1275, %v1652
    %v1654 = vpop.f32.mrf.mxu0
    %v1655 = vadd.f32 %v1275, %v1654
    %1656 = vmatmul.bf16.gmra.mxu0 %v1206
    %v1657 = vpop.f32.mrf.mxu0
    %v1658 = vadd.f32 %v1275, %v1657
    %v1659 = vpop.f32.mrf.mxu0
    %v1660 = vadd.f32 %v1275, %v1659
    %1661 = vdwg.mxu0
    %1662 = vmatpush.bf16.msra.mxu0 %v1515
    %1663 = vmatpush.bf16.msra.mxu0 %v1508
    %1664 = vmatpush.bf16.msra.mxu0 %v1501
    %1665 = vmatpush.bf16.msra.mxu0 %v1494
    %1666 = vmatpush.bf16.msra.mxu0 %v1487
    %1667 = vmatpush.bf16.msra.mxu0 %v1480
    %1668 = vmatpush.bf16.msra.mxu0 %v1473
    %1669 = vmatpush.bf16.msra.mxu0 %v1466
    %1670 = vmatmul.bf16.gmra.mxu0 %v1203
    %v1671 = vpop.f32.mrf.mxu0
    %v1672 = vadd.f32 %v1276, %v1671
    %v1673 = vpop.f32.mrf.mxu0
    %v1674 = vadd.f32 %v1276, %v1673
    %1675 = vmatmul.bf16.gmra.mxu0 %v1204
    %v1676 = vpop.f32.mrf.mxu0
    %v1677 = vadd.f32 %v1276, %v1676
    %v1678 = vpop.f32.mrf.mxu0
    %v1679 = vadd.f32 %v1276, %v1678
    %1680 = vmatmul.bf16.gmra.mxu0 %v1205
    %v1681 = vpop.f32.mrf.mxu0
    %v1682 = vadd.f32 %v1276, %v1681
    %v1683 = vpop.f32.mrf.mxu0
    %v1684 = vadd.f32 %v1276, %v1683
    %1685 = vmatmul.bf16.gmra.mxu0 %v1206
    %v1686 = vpop.f32.mrf.mxu0
    %v1687 = vadd.f32 %v1276, %v1686
    %v1688 = vpop.f32.mrf.mxu0
    %v1689 = vadd.f32 %v1276, %v1688
    %1690 = vdwg.mxu0
    %1691 = vmatpush.bf16.msra.mxu0 %v1516
    %1692 = vmatpush.bf16.msra.mxu0 %v1509
    %1693 = vmatpush.bf16.msra.mxu0 %v1502
    %1694 = vmatpush.bf16.msra.mxu0 %v1495
    %1695 = vmatpush.bf16.msra.mxu0 %v1488
    %1696 = vmatpush.bf16.msra.mxu0 %v1481
    %1697 = vmatpush.bf16.msra.mxu0 %v1474
    %1698 = vmatpush.bf16.msra.mxu0 %v1467
    %1699 = vmatmul.bf16.gmra.mxu0 %v1203
    %v1700 = vpop.f32.mrf.mxu0
    %v1701 = vadd.f32 %v1277, %v1700
    %v1702 = vpop.f32.mrf.mxu0
    %v1703 = vadd.f32 %v1277, %v1702
    %1704 = vmatmul.bf16.gmra.mxu0 %v1204
    %v1705 = vpop.f32.mrf.mxu0
    %v1706 = vadd.f32 %v1277, %v1705
    %v1707 = vpop.f32.mrf.mxu0
    %v1708 = vadd.f32 %v1277, %v1707
    %1709 = vmatmul.bf16.gmra.mxu0 %v1205
    %v1710 = vpop.f32.mrf.mxu0
    %v1711 = vadd.f32 %v1277, %v1710
    %v1712 = vpop.f32.mrf.mxu0
    %v1713 = vadd.f32 %v1277, %v1712
    %1714 = vmatmul.bf16.gmra.mxu0 %v1206
    %v1715 = vpop.f32.mrf.mxu0
    %v1716 = vadd.f32 %v1277, %v1715
    %v1717 = vpop.f32.mrf.mxu0
    %v1718 = vadd.f32 %v1277, %v1717
    %1719 = vdwg.mxu0
    %1720 = vmatpush.bf16.msra.mxu0 %v1517
    %1721 = vmatpush.bf16.msra.mxu0 %v1510
    %1722 = vmatpush.bf16.msra.mxu0 %v1503
    %1723 = vmatpush.bf16.msra.mxu0 %v1496
    %1724 = vmatpush.bf16.msra.mxu0 %v1489
    %1725 = vmatpush.bf16.msra.mxu0 %v1482
    %1726 = vmatpush.bf16.msra.mxu0 %v1475
    %1727 = vmatpush.bf16.msra.mxu0 %v1468
    %1728 = vmatmul.bf16.gmra.mxu0 %v1203
    %v1729 = vpop.f32.mrf.mxu0
    %v1730 = vadd.f32 %v1278, %v1729
    %v1731 = vpop.f32.mrf.mxu0
    %v1732 = vadd.f32 %v1278, %v1731
    %1733 = vmatmul.bf16.gmra.mxu0 %v1204
    %v1734 = vpop.f32.mrf.mxu0
    %v1735 = vadd.f32 %v1278, %v1734
    %v1736 = vpop.f32.mrf.mxu0
    %v1737 = vadd.f32 %v1278, %v1736
    %1738 = vmatmul.bf16.gmra.mxu0 %v1205
    %v1739 = vpop.f32.mrf.mxu0
    %v1740 = vadd.f32 %v1278, %v1739
    %v1741 = vpop.f32.mrf.mxu0
    %v1742 = vadd.f32 %v1278, %v1741
    %1743 = vmatmul.bf16.gmra.mxu0 %v1206
    %v1744 = vpop.f32.mrf.mxu0
    %v1745 = vadd.f32 %v1278, %v1744
    %v1746 = vpop.f32.mrf.mxu0
    %v1747 = vadd.f32 %v1278, %v1746
    %1748 = vdwg.mxu0
    %1749 = vmatpush.bf16.msra.mxu0 %v1518
    %1750 = vmatpush.bf16.msra.mxu0 %v1511
    %1751 = vmatpush.bf16.msra.mxu0 %v1504
    %1752 = vmatpush.bf16.msra.mxu0 %v1497
    %1753 = vmatpush.bf16.msra.mxu0 %v1490
    %1754 = vmatpush.bf16.msra.mxu0 %v1483
    %1755 = vmatpush.bf16.msra.mxu0 %v1476
    %1756 = vmatpush.bf16.msra.mxu0 %v1469
    %1757 = vmatmul.bf16.gmra.mxu0 %v1203
    %v1758 = vpop.f32.mrf.mxu0
    %v1759 = vadd.f32 %v1279, %v1758
    %v1760 = vpop.f32.mrf.mxu0
    %v1761 = vadd.f32 %v1279, %v1760
    %1762 = vmatmul.bf16.gmra.mxu0 %v1204
    %v1763 = vpop.f32.mrf.mxu0
    %v1764 = vadd.f32 %v1279, %v1763
    %v1765 = vpop.f32.mrf.mxu0
    %v1766 = vadd.f32 %v1279, %v1765
    %1767 = vmatmul.bf16.gmra.mxu0 %v1205
    %v1768 = vpop.f32.mrf.mxu0
    %v1769 = vadd.f32 %v1279, %v1768
    %v1770 = vpop.f32.mrf.mxu0
    %v1771 = vadd.f32 %v1279, %v1770
    %1772 = vmatmul.bf16.gmra.mxu0 %v1206
    %v1773 = vpop.f32.mrf.mxu0
    %v1774 = vadd.f32 %v1279, %v1773
    %v1775 = vpop.f32.mrf.mxu0
    %v1776 = vadd.f32 %v1279, %v1775
    %1777 = vdwg.mxu0
    %v1778 = vtanh.pop %v1585
    %v1779 = vtanh.pop %v1614
    %v1780 = vtanh.pop %v1643
    %v1781 = vtanh.pop %v1672
    %v1782 = vtanh.pop %v1701
    %v1783 = vtanh.pop %v1730
    %v1784 = vtanh.pop %v1759
    %v1785 = vtanh.pop %v1587
    %v1786 = vtanh.pop %v1616
    %v1787 = vtanh.pop %v1645
    %v1788 = vtanh.pop %v1674
    %v1789 = vtanh.pop %v1703
    %v1790 = vtanh.pop %v1732
    %v1791 = vtanh.pop %v1761
    %v1792 = vtanh.pop %v1590
    %v1793 = vtanh.pop %v1619
    %v1794 = vtanh.pop %v1648
    %v1795 = vtanh.pop %v1677
    %v1796 = vtanh.pop %v1706
    %v1797 = vtanh.pop %v1735
    %v1798 = vtanh.pop %v1764
    %v1799 = vtanh.pop %v1592
    %v1800 = vtanh.pop %v1621
    %v1801 = vtanh.pop %v1650
    %v1802 = vtanh.pop %v1679
    %v1803 = vtanh.pop %v1708
    %v1804 = vtanh.pop %v1737
    %v1805 = vtanh.pop %v1766
    %v1806 = vtanh.pop %v1595
    %v1807 = vtanh.pop %v1624
    %v1808 = vtanh.pop %v1653
    %v1809 = vtanh.pop %v1682
    %v1810 = vtanh.pop %v1711
    %v1811 = vtanh.pop %v1740
    %v1812 = vtanh.pop %v1769
    %v1813 = vtanh.pop %v1597
    %v1814 = vtanh.pop %v1626
    %v1815 = vtanh.pop %v1655
    %v1816 = vtanh.pop %v1684
    %v1817 = vtanh.pop %v1713
    %v1818 = vtanh.pop %v1742
    %v1819 = vtanh.pop %v1771
    %v1820 = vtanh.pop %v1600
    %v1821 = vtanh.pop %v1629
    %v1822 = vtanh.pop %v1658
    %v1823 = vtanh.pop %v1687
    %v1824 = vtanh.pop %v1716
    %v1825 = vtanh.pop %v1745
    %v1826 = vtanh.pop %v1774
    %v1827 = vtanh.pop %v1602
    %v1828 = vtanh.pop %v1631
    %v1829 = vtanh.pop %v1660
    %v1830 = vtanh.pop %v1689
    %v1831 = vtanh.pop %v1718
    %v1832 = vtanh.pop %v1747
    %v1833 = vtanh.pop %v1776
    %v1834 = vpack.c.bf16 %v1779, %v1778
    %v1835 = vpack.c.bf16 %v1781, %v1780
    %v1836 = vpack.c.bf16 %v1783, %v1782
    %v1837 = vpack.c.bf16 %v1784, %v1784
    %v1838 = vpack.c.bf16 %v1786, %v1785
    %v1839 = vpack.c.bf16 %v1788, %v1787
    %v1840 = vpack.c.bf16 %v1790, %v1789
    %v1841 = vpack.c.bf16 %v1791, %v1791
    %v1842 = vpack.c.bf16 %v1793, %v1792
    %v1843 = vpack.c.bf16 %v1795, %v1794
    %v1844 = vpack.c.bf16 %v1797, %v1796
    %v1845 = vpack.c.bf16 %v1798, %v1798
    %v1846 = vpack.c.bf16 %v1800, %v1799
    %v1847 = vpack.c.bf16 %v1802, %v1801
    %v1848 = vpack.c.bf16 %v1804, %v1803
    %v1849 = vpack.c.bf16 %v1805, %v1805
    %v1850 = vpack.c.bf16 %v1807, %v1806
    %v1851 = vpack.c.bf16 %v1809, %v1808
    %v1852 = vpack.c.bf16 %v1811, %v1810
    %v1853 = vpack.c.bf16 %v1812, %v1812
    %v1854 = vpack.c.bf16 %v1814, %v1813
    %v1855 = vpack.c.bf16 %v1816, %v1815
    %v1856 = vpack.c.bf16 %v1818, %v1817
    %v1857 = vpack.c.bf16 %v1819, %v1819
    %v1858 = vpack.c.bf16 %v1821, %v1820
    %v1859 = vpack.c.bf16 %v1823, %v1822
    %v1860 = vpack.c.bf16 %v1825, %v1824
    %v1861 = vpack.c.bf16 %v1826, %v1826
    %v1862 = vpack.c.bf16 %v1828, %v1827
    %v1863 = vpack.c.bf16 %v1830, %v1829
    %v1864 = vpack.c.bf16 %v1832, %v1831
    %v1865 = vpack.c.bf16 %v1833, %v1833
    %1866 = vst [vmem:[%s9] sm:$0xff] %v1834
    %1867 = vst [vmem:[%s9 + $0x8] sm:$0xff] %v1835
    %1868 = vst [vmem:[%s9 + $0x10] sm:$0xff] %v1836
    %1869 = vst [vmem:[%s9 + $0x18] sm:$0xf] %v1837
    %1870 = vst [vmem:[%s9 + $0x1c] sm:$0xff] %v1838
    %1871 = vst [vmem:[%s9 + $0x24] sm:$0xff] %v1839
    %1872 = vst [vmem:[%s9 + $0x2c] sm:$0xff] %v1840
    %1873 = vst [vmem:[%s9 + $0x34] sm:$0xf] %v1841
    %1874 = vst [vmem:[%s9 + $0x38] sm:$0xff] %v1842
    %1875 = vst [vmem:[%s9 + $0x40] sm:$0xff] %v1843
    %1876 = vst [vmem:[%s9 + $0x48] sm:$0xff] %v1844
    %1877 = vst [vmem:[%s9 + $0x50] sm:$0xf] %v1845
    %1878 = vst [vmem:[%s9 + $0x54] sm:$0xff] %v1846
    %1879 = vst [vmem:[%s9 + $0x5c] sm:$0xff] %v1847
    %1880 = vst [vmem:[%s9 + $0x64] sm:$0xff] %v1848
    %1881 = vst [vmem:[%s9 + $0x6c] sm:$0xf] %v1849
    %1882 = vst [vmem:[%s9 + $0x70] sm:$0xff] %v1850
    %1883 = vst [vmem:[%s9 + $0x78] sm:$0xff] %v1851
    %1884 = vst [vmem:[%s9 + $0x80] sm:$0xff] %v1852
    %1885 = vst [vmem:[%s9 + $0x88] sm:$0xf] %v1853
    %1886 = vst [vmem:[%s9 + $0x8c] sm:$0xff] %v1854
    %1887 = vst [vmem:[%s9 + $0x94] sm:$0xff] %v1855
    %1888 = vst [vmem:[%s9 + $0x9c] sm:$0xff] %v1856
    %1889 = vst [vmem:[%s9 + $0xa4] sm:$0xf] %v1857
    %1890 = vst [vmem:[%s9 + $0xa8] sm:$0xff] %v1858
    %1891 = vst [vmem:[%s9 + $0xb0] sm:$0xff] %v1859
    %1892 = vst [vmem:[%s9 + $0xb8] sm:$0xff] %v1860
    %1893 = vst [vmem:[%s9 + $0xc0] sm:$0xf] %v1861
    %1894 = vst [vmem:[%s9 + $0xc4] sm:$0xff] %v1862
    %1895 = vst [vmem:[%s9 + $0xcc] sm:$0xff] %v1863
    %1896 = vst [vmem:[%s9 + $0xd4] sm:$0xff] %v1864
    %1897 = vst [vmem:[%s9 + $0xdc] sm:$0xf] %v1865
    // Predicated region
    $region54: #{generator_forward.1} parent=1 // pred_check
      _
    $region55: #{generator_forward.1} parent=1 // pred_check_branch
      %1899 = sbr.rel (0) target = $region57
    $region56: #{generator_forward.1} parent=1 // pred_region
      _
    $region57: #{generator_forward.1} parent=1 // pred_fallthru
      _
    // Predicated region
    $region58: #{generator_forward.1} parent=1 // pred_check
      _
    $region59: #{generator_forward.1} parent=1 // pred_check_branch
      %1901 = sbr.rel (0) target = $region61
    $region60: #{generator_forward.1} parent=1 // pred_region
      _
    $region61: #{generator_forward.1} parent=1 // pred_fallthru
      _
    %1902 = vsyncpa [#allocation3], 1
    %1903 = vsyncpa [#allocation5], 1
    %1904 = vsyncpa [#allocation8], 1

</llo_original>
